<compile_context>
chip_gen: v5e
topology: v5e:2x2
jax: 0.10.0
libtpu: 0.0.40
codegen_flags: <defaults>
</compile_context>

<pallas_src>
import functools

import jax
import jax.numpy as jnp
from jax.experimental import pallas as pl
from jax.experimental.pallas import tpu as pltpu


NUM_CLASSES = 250


def _round_up(x, m):
    return (x + m - 1) // m * m


def _encoder_kernel(p_ref, pool_ref, wc_ref, bc_ref, wh_ref, bh_ref, out_ref):
    """conv3x3(as one matmul) + bias + ReLU + GAP(as matmul) + linear head.

    p_ref   : (Bt*HW, Kp) bf16  im2col patches for Bt images (K zero-padded)
    pool_ref: (Bt, Bt*HW) bf16  block-diagonal mean-pool matrix (1/HW folded in)
    wc_ref  : (Kp, C)     bf16  conv weight (zero-padded rows)
    bc_ref  : (1, C)      f32   conv bias
    wh_ref  : (C, Np)     bf16  classifier weight (zero-padded cols, Np=256)
    bh_ref  : (1, Np)     f32   classifier bias (zero-padded)
    out_ref : (Bt, Np)    f32   padded logits (lane-dense)
    """
    # Conv as one big bf16 MXU matmul, f32 accumulate.
    feat = jnp.dot(p_ref[...], wc_ref[...], preferred_element_type=jnp.float32)
    feat = jnp.maximum(feat + bc_ref[...], 0.0)                  # bias + ReLU (f32, VPU)

    # Global average pool on the MXU: (Bt, Bt*HW) @ (Bt*HW, C) -> (Bt, C).
    # pool_ref already carries the 1/HW scale, so this IS the mean.
    pooled = jnp.dot(pool_ref[...], feat.astype(jnp.bfloat16),
                     preferred_element_type=jnp.float32)

    # Classifier head: (Bt, C) @ (C, 256) + bias.
    logits = jnp.dot(pooled.astype(jnp.bfloat16), wh_ref[...],
                     preferred_element_type=jnp.float32) + bh_ref[...]
    out_ref[...] = logits                                        # (Bt, 256) f32 store


def _im2col_3x3(x_nhwc):
    """3x3, stride 1, pad 1 patch extraction. (B,H,W,Cin) -> (B, H*W, 9*Cin)."""
    B, H, W, Cin = x_nhwc.shape
    xp = jnp.pad(x_nhwc, ((0, 0), (1, 1), (1, 1), (0, 0)))
    slabs = [xp[:, dy:dy + H, dx:dx + W, :] for dy in range(3) for dx in range(3)]
    patches = jnp.concatenate(slabs, axis=-1)                    # (B, H, W, 9*Cin)
    return patches.reshape(B, H * W, 9 * Cin)


@functools.partial(jax.jit, static_argnames=("num_classes", "batch_tile"))
def img_model_v0_forward(img_nchw, params, num_classes=NUM_CLASSES, batch_tile=8):
    """Forward pass matching ImgModelV0.forward(img): returns (B, num_classes)."""
    wc, bc, wh, bh = params["wc"], params["bc"], params["wh"], params["bh"]
    B, Cin, H, W = img_nchw.shape
    HW = H * W
    K = 9 * Cin
    C = wc.shape[1]
    Kp = _round_up(K, 32)                  # pad contraction dim (27 -> 32)
    Np = _round_up(num_classes, 128)       # lane-dense classifier width (250 -> 256)
    Bt = min(batch_tile, B)
    assert B % Bt == 0, "batch must be divisible by the batch tile"

    # ---- wrapper-side glue: NCHW->NHWC, im2col, pad, bf16 casts ----
    x_nhwc = jnp.transpose(img_nchw, (0, 2, 3, 1))
    patches = _im2col_3x3(x_nhwc).reshape(B * HW, K)             # (B*HW, K) f32
    patches = jnp.pad(patches, ((0, 0), (0, Kp - K))).astype(jnp.bfloat16)
    wc_p = jnp.pad(wc, ((0, Kp - K), (0, 0))).astype(jnp.bfloat16)
    wh_p = jnp.pad(wh, ((0, 0), (0, Np - num_classes))).astype(jnp.bfloat16)
    bh_p = jnp.pad(bh, ((0, 0), (0, Np - num_classes)))
    # Block-diagonal mean-pool matrix (Bt, Bt*HW); 1/HW folded in (exact in bf16).
    pool = (jnp.repeat(jnp.eye(Bt, dtype=jnp.float32), HW, axis=1) / HW
            ).astype(jnp.bfloat16)

    out_padded = pl.pallas_call(
        _encoder_kernel,
        out_shape=jax.ShapeDtypeStruct((B, Np), jnp.float32),
        grid_spec=pltpu.PrefetchScalarGridSpec(
            num_scalar_prefetch=0,
            grid=(B // Bt,),                                     # batch-tile grid
            in_specs=[
                pl.BlockSpec((Bt * HW, Kp), lambda b: (b, 0)),   # patches tile
                pl.BlockSpec((Bt, Bt * HW), lambda b: (0, 0)),   # pool matrix
                pl.BlockSpec((Kp, C), lambda b: (0, 0)),         # conv W
                pl.BlockSpec((1, C), lambda b: (0, 0)),          # conv b
                pl.BlockSpec((C, Np), lambda b: (0, 0)),         # head W
                pl.BlockSpec((1, Np), lambda b: (0, 0)),         # head b
            ],
            out_specs=pl.BlockSpec((Bt, Np), lambda b: (b, 0)),
        ),
        compiler_params=pltpu.CompilerParams(
            dimension_semantics=("parallel",),     # megacore-shard batch tiles (v7x)
            vmem_limit_bytes=32 * 1024 * 1024,     # safe on v5e/v6e/v7x; blocks are tiny
        ),
    )(patches, pool, wc_p, bc, wh_p, bh_p)
    return out_padded[:, :num_classes]


def init_params(key, in_channels=3, hidden=32, num_classes=NUM_CLASSES):
    """Deterministic synthetic encoder parameters (shapes implied by the module)."""
    k1, k2, k3, k4 = jax.random.split(key, 4)
    K = 9 * in_channels
    wc = jax.random.normal(k1, (K, hidden), jnp.float32) * 0.1
    bc = jax.random.normal(k2, (1, hidden), jnp.float32) * 0.01
    wh = jax.random.normal(k3, (hidden, num_classes), jnp.float32) * 0.1
    bh = jax.random.normal(k4, (1, num_classes), jnp.float32) * 0.01
    return {"wc": wc, "bc": bc, "wh": wh, "bh": bh}


def _reference_forward(img_nchw, params):
    """Pure-JAX reference with the same bf16 quantization points as the kernel."""
    f32 = jnp.float32
    hp = jax.lax.Precision.HIGHEST
    x_nhwc = jnp.transpose(img_nchw, (0, 2, 3, 1))
    patches = _im2col_3x3(x_nhwc)                                # (B, HW, K)
    p = patches.astype(jnp.bfloat16).astype(f32)
    wc = params["wc"].astype(jnp.bfloat16).astype(f32)
    wh = params["wh"].astype(jnp.bfloat16).astype(f32)
    feat = jnp.maximum(jnp.einsum("bpk,kc->bpc", p, wc, precision=hp)
                       + params["bc"], 0.0)
    feat = feat.astype(jnp.bfloat16).astype(f32)
    pooled = feat.mean(axis=1).astype(jnp.bfloat16).astype(f32)  # (B, C)
    return jnp.einsum("bc,cn->bn", pooled, wh, precision=hp) + params["bh"]


if __name__ == "__main__":
    key = jax.random.PRNGKey(0)
    kx, kp = jax.random.split(key)

    B, Cin, H, W = 16, 3, 16, 16
    img = jax.random.normal(kx, (B, Cin, H, W), jnp.float32)     # NCHW, like PyTorch
    params = init_params(kp, in_channels=Cin, hidden=32, num_classes=NUM_CLASSES)

    logits = img_model_v0_forward(img, params, num_classes=NUM_CLASSES, batch_tile=8)
    logits = jax.block_until_ready(logits)

    ref = _reference_forward(img, params)
    assert logits.shape == (B, NUM_CLASSES), logits.shape
    assert jnp.allclose(logits, ref, atol=5e-3, rtol=5e-2), (
        "mismatch vs reference, max abs err = "
        + str(float(jnp.max(jnp.abs(logits - ref)))))

    # TODO(synk): the real timm backbone (arbitrary `backbone` string, pretrained
    # weights) has no in-script equivalent; a representative conv3x3 -> ReLU ->
    # GAP -> Linear(250) encoder with identical head semantics is used instead.
    print("KERNEL_OK")
</pallas_src>

<mosaic_0001>
module attributes {stable_mosaic.version = 11 : i64} {
  func.func @_encoder_kernel(%arg0: i32, %arg1: memref<2048x32xbf16, #tpu.memory_space<vmem>>, %arg2: memref<8x2048xbf16, #tpu.memory_space<vmem>>, %arg3: memref<32x32xbf16, #tpu.memory_space<vmem>>, %arg4: memref<1x32xf32, #tpu.memory_space<vmem>>, %arg5: memref<32x256xbf16, #tpu.memory_space<vmem>>, %arg6: memref<1x256xf32, #tpu.memory_space<vmem>>, %arg7: memref<8x256xf32, #tpu.memory_space<vmem>>) attributes {dimension_semantics = [#tpu.dimension_semantics<parallel>], iteration_bounds = array<i64: 2>, scalar_prefetch = 0 : i64, scratch_operands = 0 : i64, tpu.core_type = #tpu.core_type<tc>, window_params = [{transform_indices = @transform_0, window_bounds = array<i64: 2048, 32>}, {pipeline_mode = #tpu.pipeline_mode<synchronous>, transform_indices = @transform_1, window_bounds = array<i64: 8, 2048>}, {pipeline_mode = #tpu.pipeline_mode<synchronous>, transform_indices = @transform_2, window_bounds = array<i64: 32, 32>}, {pipeline_mode = #tpu.pipeline_mode<synchronous>, transform_indices = @transform_3, window_bounds = array<i64: 1, 32>}, {pipeline_mode = #tpu.pipeline_mode<synchronous>, transform_indices = @transform_4, window_bounds = array<i64: 32, 256>}, {pipeline_mode = #tpu.pipeline_mode<synchronous>, transform_indices = @transform_5, window_bounds = array<i64: 1, 256>}, {transform_indices = @transform_6, window_bounds = array<i64: 8, 256>}]} {
    %c0 = arith.constant 0 : index
    %c0_0 = arith.constant 0 : index
    %0 = vector.load %arg1[%c0, %c0_0] : memref<2048x32xbf16, #tpu.memory_space<vmem>>, vector<2048x32xbf16>
    %c0_1 = arith.constant 0 : index
    %c0_2 = arith.constant 0 : index
    %1 = vector.load %arg3[%c0_1, %c0_2] : memref<32x32xbf16, #tpu.memory_space<vmem>>, vector<32x32xbf16>
    %cst = arith.constant dense<0.000000e+00> : vector<2048x32xf32>
    %2 = tpu.matmul %0, %1, %cst {dimension_numbers = #tpu.dot_dimension_numbers<[1], [0], [0], [1], [0, 0, 1, 1], [], []>} : vector<2048x32xbf16>, vector<32x32xbf16>, vector<2048x32xf32> -> vector<2048x32xf32>
    %c0_3 = arith.constant 0 : index
    %c0_4 = arith.constant 0 : index
    %3 = vector.load %arg4[%c0_3, %c0_4] : memref<1x32xf32, #tpu.memory_space<vmem>>, vector<1x32xf32>
    %4 = vector.broadcast %3 : vector<1x32xf32> to vector<2048x32xf32>
    %5 = arith.addf %2, %4 : vector<2048x32xf32>
    %cst_5 = arith.constant 0.000000e+00 : f32
    %6 = vector.broadcast %cst_5 : f32 to vector<2048x32xf32>
    %7 = arith.maximumf %5, %6 : vector<2048x32xf32>
    %c0_6 = arith.constant 0 : index
    %c0_7 = arith.constant 0 : index
    %8 = vector.load %arg2[%c0_6, %c0_7] : memref<8x2048xbf16, #tpu.memory_space<vmem>>, vector<8x2048xbf16>
    %9 = arith.truncf %7 : vector<2048x32xf32> to vector<2048x32xbf16>
    %cst_8 = arith.constant dense<0.000000e+00> : vector<8x32xf32>
    %10 = tpu.matmul %8, %9, %cst_8 {dimension_numbers = #tpu.dot_dimension_numbers<[1], [0], [0], [1], [0, 0, 1, 1], [], []>} : vector<8x2048xbf16>, vector<2048x32xbf16>, vector<8x32xf32> -> vector<8x32xf32>
    %11 = arith.truncf %10 : vector<8x32xf32> to vector<8x32xbf16>
    %c0_9 = arith.constant 0 : index
    %c0_10 = arith.constant 0 : index
    %12 = vector.load %arg5[%c0_9, %c0_10] : memref<32x256xbf16, #tpu.memory_space<vmem>>, vector<32x256xbf16>
    %cst_11 = arith.constant dense<0.000000e+00> : vector<8x256xf32>
    %13 = tpu.matmul %11, %12, %cst_11 {dimension_numbers = #tpu.dot_dimension_numbers<[1], [0], [0], [1], [0, 0, 1, 1], [], []>} : vector<8x32xbf16>, vector<32x256xbf16>, vector<8x256xf32> -> vector<8x256xf32>
    %c0_12 = arith.constant 0 : index
    %c0_13 = arith.constant 0 : index
    %14 = vector.load %arg6[%c0_12, %c0_13] : memref<1x256xf32, #tpu.memory_space<vmem>>, vector<1x256xf32>
    %15 = vector.broadcast %14 : vector<1x256xf32> to vector<8x256xf32>
    %16 = arith.addf %13, %15 : vector<8x256xf32>
    %c0_14 = arith.constant 0 : index
    %c0_15 = arith.constant 0 : index
    %17 = vector.load %arg7[%c0_14, %c0_15] : memref<8x256xf32, #tpu.memory_space<vmem>>, vector<8x256xf32>
    tpu.vector_store %arg7[%c0_14, %c0_15], %16 {strides = array<i32>} : memref<8x256xf32, #tpu.memory_space<vmem>>, vector<8x256xf32>,
    return
  }
  func.func @transform_0(%arg0: i32) -> (i32, i32) {
    %c0_i32 = arith.constant 0 : i32
    %c0_i32_0 = arith.constant 0 : i32
    return %arg0, %c0_i32 : i32, i32
  }
  func.func @transform_1(%arg0: i32) -> (i32, i32) {
    %c0_i32 = arith.constant 0 : i32
    %c0_i32_0 = arith.constant 0 : i32
    %c0_i32_1 = arith.constant 0 : i32
    return %c0_i32, %c0_i32_0 : i32, i32
  }
  func.func @transform_2(%arg0: i32) -> (i32, i32) {
    %c0_i32 = arith.constant 0 : i32
    %c0_i32_0 = arith.constant 0 : i32
    %c0_i32_1 = arith.constant 0 : i32
    return %c0_i32, %c0_i32_0 : i32, i32
  }
  func.func @transform_3(%arg0: i32) -> (i32, i32) {
    %c0_i32 = arith.constant 0 : i32
    %c0_i32_0 = arith.constant 0 : i32
    %c0_i32_1 = arith.constant 0 : i32
    return %c0_i32, %c0_i32_0 : i32, i32
  }
  func.func @transform_4(%arg0: i32) -> (i32, i32) {
    %c0_i32 = arith.constant 0 : i32
    %c0_i32_0 = arith.constant 0 : i32
    %c0_i32_1 = arith.constant 0 : i32
    return %c0_i32, %c0_i32_0 : i32, i32
  }
  func.func @transform_5(%arg0: i32) -> (i32, i32) {
    %c0_i32 = arith.constant 0 : i32
    %c0_i32_0 = arith.constant 0 : i32
    %c0_i32_1 = arith.constant 0 : i32
    return %c0_i32, %c0_i32_0 : i32, i32
  }
  func.func @transform_6(%arg0: i32) -> (i32, i32) {
    %c0_i32 = arith.constant 0 : i32
    %c0_i32_0 = arith.constant 0 : i32
    return %arg0, %c0_i32 : i32, i32
  }
}

</mosaic_0001>

<llo_original>
// kernel: img_model_v0_forward.1
$region0: #{img_model_v0_forward.1}
  #allocation0 [shape = 'u32[]', space=smem, size = 0x4, offset = 0x4, fixed_abs, tag = 'smem constant byte address 0x4 - core index']
  #allocation1 [shape = 'u32[72,128]{1,0:T(1,128)}', space=vmem, size = 0x9000, scoped, tag = 'internal scratch']
  %s0 = inlined_call_operand.vmem [shape: bf16[4096,32], index: 0, kind: input, shape index: {}]
  %s1 = inlined_call_operand.vmem [shape: bf16[8,2048], index: 1, kind: input, shape index: {}]
  %s2 = inlined_call_operand.vmem [shape: bf16[32,32], index: 2, kind: input, shape index: {}]
  %s3 = inlined_call_operand.vmem [shape: f32[1,32], index: 3, kind: input, shape index: {}]
  %s4 = inlined_call_operand.vmem [shape: bf16[32,256], index: 4, kind: input, shape index: {}]
  %s5 = inlined_call_operand.vmem [shape: f32[1,256], index: 5, kind: input, shape index: {}]
  %s6 = inlined_call_operand.hbm [shape: f32[16,256], index: 6, kind: output, shape index: {}]
  %s7 = sld [smem:[#allocation0]]
  $region57: #{img_model_v0_forward.1} parent=0
    _
  %s9 = ssub.s32 1, %s7
  %s10 = scalar_select 0, %s9, %s7
  $region1: #{img_model_v0_forward.1} parent=0
    #allocation2 [shape = 'u8[16384]{0}', space=vmem, size = 0x4000, scoped, tag = 'output window, operand 0']
    #allocation3 [shape = 's32[2]{0}', space=sflag, size = 0x8, scoped, tag = 'scoped memory for img_model_v0_forward.1']
    %11 = vsyncpa [#allocation3], 0
    %s12 = scalar_lea.sflag [#allocation3], 1
    %13 = vsyncpa %s12, 0
    loop: start=0, step=1, limit=4
    $region2: #{img_model_v0_forward.1} parent=1 // loop_pre_header
      _
    $region3: #{img_model_v0_forward.1} parent=1 // loop_header
      %s15 = sphi 0, %s19
      %p16 = scmp.ge.s32.totalorder %s15, 4
      %s25 = sphi 0, %s27
      %s28 = sphi 0, %s25
      %s29 = sphi 0, %s28
      %s45 = sphi 0, %s29
      %s49 = sphi 0, %s49
      %s51 = sphi 0, %s49
      %s52 = sphi 0, %s51
      %s66 = sphi 0, %s52
      %s70 = sphi 0, %s70
      %s72 = sphi 0, %s70
      %s73 = sphi 0, %s72
      %s87 = sphi 0, %s73
      %s91 = sphi 0, %s91
      %s93 = sphi 0, %s91
      %s94 = sphi 0, %s93
      %s108 = sphi 0, %s94
      %s112 = sphi 0, %s112
      %s114 = sphi 0, %s112
      %s115 = sphi 0, %s114
      %s129 = sphi 0, %s115
      %s133 = sphi 0, %s133
      %s135 = sphi 0, %s133
      %s136 = sphi 0, %s135
      %s150 = sphi 0, %s136
      %s156 = sphi 0, %s158
      %s159 = sphi 0, %s156
      %s160 = sphi 0, %s159
      %s176 = sphi 0, %s160
    $region4: #{img_model_v0_forward.1} parent=1 // loop_header_branch
      %18 = sbr.rel (%p16) target = $region8
    $region5: #{img_model_v0_forward.1} parent=1 // loop_body
      %s20 = ssub.s32 %s15, 1
      %s21 = ssub.s32 %s15, 2
      %s22 = sadd.s32 %s15, 1
      %s23 = ssub.s32 %s15, %s22
      %p24 = scmp.eq.s32.totalorder %s23, 0
      %s26 = sadd.s32 %s25, 1
      %s27 = scalar_select %p24, %s25, %s26
      %p30 = pneg %p24
      %p31 = scmp.eq.s32.totalorder %s15, 1
      %p32 = por %p30, %p31
      %p33 = scmp.ne.s32.totalorder %s25, %s28
      %p34 = scmp.eq.s32.totalorder %s15, 0
      %p35 = por %p33, %p34
      %p36 = scmp.ne.s32.totalorder %s25, %s28
      %p37 = scmp.eq.s32.totalorder %s20, 1
      %p38 = por %p36, %p37
      %p39 = scmp.ne.s32.totalorder %s28, %s29
      %p40 = scmp.eq.s32.totalorder %s20, 0
      %p41 = por %p39, %p40
      %p42 = scmp.ne.s32.totalorder %s28, %s29
      %p43 = scmp.eq.s32.totalorder %s21, 1
      %p44 = por %p42, %p43
      %p46 = scmp.ne.s32.totalorder %s29, %s45
      %p47 = scmp.eq.s32.totalorder %s21, 0
      %p48 = por %p46, %p47
      %s50 = sadd.s32 %s49, 1
      %p53 = scmp.eq.s32.totalorder %s15, 1
      %p54 = scmp.ne.s32.totalorder %s49, %s51
      %p55 = scmp.eq.s32.totalorder %s15, 0
      %p56 = por %p54, %p55
      %p57 = scmp.ne.s32.totalorder %s49, %s51
      %p58 = scmp.eq.s32.totalorder %s20, 1
      %p59 = por %p57, %p58
      %p60 = scmp.ne.s32.totalorder %s51, %s52
      %p61 = scmp.eq.s32.totalorder %s20, 0
      %p62 = por %p60, %p61
      %p63 = scmp.ne.s32.totalorder %s51, %s52
      %p64 = scmp.eq.s32.totalorder %s21, 1
      %p65 = por %p63, %p64
      %p67 = scmp.ne.s32.totalorder %s52, %s66
      %p68 = scmp.eq.s32.totalorder %s21, 0
      %p69 = por %p67, %p68
      %s71 = sadd.s32 %s70, 1
      %p74 = scmp.eq.s32.totalorder %s15, 1
      %p75 = scmp.ne.s32.totalorder %s70, %s72
      %p76 = scmp.eq.s32.totalorder %s15, 0
      %p77 = por %p75, %p76
      %p78 = scmp.ne.s32.totalorder %s70, %s72
      %p79 = scmp.eq.s32.totalorder %s20, 1
      %p80 = por %p78, %p79
      %p81 = scmp.ne.s32.totalorder %s72, %s73
      %p82 = scmp.eq.s32.totalorder %s20, 0
      %p83 = por %p81, %p82
      %p84 = scmp.ne.s32.totalorder %s72, %s73
      %p85 = scmp.eq.s32.totalorder %s21, 1
      %p86 = por %p84, %p85
      %p88 = scmp.ne.s32.totalorder %s73, %s87
      %p89 = scmp.eq.s32.totalorder %s21, 0
      %p90 = por %p88, %p89
      %s92 = sadd.s32 %s91, 1
      %p95 = scmp.eq.s32.totalorder %s15, 1
      %p96 = scmp.ne.s32.totalorder %s91, %s93
      %p97 = scmp.eq.s32.totalorder %s15, 0
      %p98 = por %p96, %p97
      %p99 = scmp.ne.s32.totalorder %s91, %s93
      %p100 = scmp.eq.s32.totalorder %s20, 1
      %p101 = por %p99, %p100
      %p102 = scmp.ne.s32.totalorder %s93, %s94
      %p103 = scmp.eq.s32.totalorder %s20, 0
      %p104 = por %p102, %p103
      %p105 = scmp.ne.s32.totalorder %s93, %s94
      %p106 = scmp.eq.s32.totalorder %s21, 1
      %p107 = por %p105, %p106
      %p109 = scmp.ne.s32.totalorder %s94, %s108
      %p110 = scmp.eq.s32.totalorder %s21, 0
      %p111 = por %p109, %p110
      %s113 = sadd.s32 %s112, 1
      %p116 = scmp.eq.s32.totalorder %s15, 1
      %p117 = scmp.ne.s32.totalorder %s112, %s114
      %p118 = scmp.eq.s32.totalorder %s15, 0
      %p119 = por %p117, %p118
      %p120 = scmp.ne.s32.totalorder %s112, %s114
      %p121 = scmp.eq.s32.totalorder %s20, 1
      %p122 = por %p120, %p121
      %p123 = scmp.ne.s32.totalorder %s114, %s115
      %p124 = scmp.eq.s32.totalorder %s20, 0
      %p125 = por %p123, %p124
      %p126 = scmp.ne.s32.totalorder %s114, %s115
      %p127 = scmp.eq.s32.totalorder %s21, 1
      %p128 = por %p126, %p127
      %p130 = scmp.ne.s32.totalorder %s115, %s129
      %p131 = scmp.eq.s32.totalorder %s21, 0
      %p132 = por %p130, %p131
      %s134 = sadd.s32 %s133, 1
      %p137 = scmp.eq.s32.totalorder %s15, 1
      %p138 = scmp.ne.s32.totalorder %s133, %s135
      %p139 = scmp.eq.s32.totalorder %s15, 0
      %p140 = por %p138, %p139
      %p141 = scmp.ne.s32.totalorder %s133, %s135
      %p142 = scmp.eq.s32.totalorder %s20, 1
      %p143 = por %p141, %p142
      %p144 = scmp.ne.s32.totalorder %s135, %s136
      %p145 = scmp.eq.s32.totalorder %s20, 0
      %p146 = por %p144, %p145
      %p147 = scmp.ne.s32.totalorder %s135, %s136
      %p148 = scmp.eq.s32.totalorder %s21, 1
      %p149 = por %p147, %p148
      %p151 = scmp.ne.s32.totalorder %s136, %s150
      %p152 = scmp.eq.s32.totalorder %s21, 0
      %p153 = por %p151, %p152
      %s154 = ssub.s32 %s15, %s22
      %p155 = scmp.eq.s32.totalorder %s154, 0
      %s157 = sadd.s32 %s156, 1
      %s158 = scalar_select %p155, %s156, %s157
      %p161 = pneg %p155
      %p162 = scmp.eq.s32.totalorder %s15, 1
      %p163 = por %p161, %p162
      %p164 = scmp.ne.s32.totalorder %s156, %s159
      %p165 = scmp.eq.s32.totalorder %s15, 0
      %p166 = por %p164, %p165
      %p167 = scmp.ne.s32.totalorder %s156, %s159
      %p168 = scmp.eq.s32.totalorder %s20, 1
      %p169 = por %p167, %p168
      %p170 = scmp.ne.s32.totalorder %s159, %s160
      %p171 = scmp.eq.s32.totalorder %s20, 0
      %p172 = por %p170, %p171
      %p173 = scmp.ne.s32.totalorder %s159, %s160
      %p174 = scmp.eq.s32.totalorder %s21, 1
      %p175 = por %p173, %p174
      %p177 = scmp.ne.s32.totalorder %s160, %s176
      %p178 = scmp.eq.s32.totalorder %s21, 0
      %p179 = por %p177, %p178
      %p180 = scmp.le.s32.totalorder 1, %s15
      %p181 = scmp.lt.s32.totalorder %s15, 3
      %p182 = pnand %p180, %p181
      %p183 = pneg %p182
      // Predicated region
      $region9: #{img_model_v0_forward.1} parent=5 // pred_check
        _
      $region10: #{img_model_v0_forward.1} parent=5 // pred_check_branch
        %185 = sbr.rel (%p182) target = $region12
      $region11: #{img_model_v0_forward.1} parent=5 // pred_region
        %s186 = ssub.s32 %s15, 1
        // Predicated region
        $region13: #{img_model_v0_forward.1} parent=11 // pred_check
          %p187 = pneg %p62
        $region14: #{img_model_v0_forward.1} parent=11 // pred_check_branch
          %189 = sbr.rel (%p187) target = $region16
        $region15: #{img_model_v0_forward.1} parent=11 // pred_region
          _
        $region16: #{img_model_v0_forward.1} parent=11 // pred_fallthru
          _
        // Predicated region
        $region17: #{img_model_v0_forward.1} parent=11 // pred_check
          %p190 = pneg %p83
        $region18: #{img_model_v0_forward.1} parent=11 // pred_check_branch
          %192 = sbr.rel (%p190) target = $region20
        $region19: #{img_model_v0_forward.1} parent=11 // pred_region
          _
        $region20: #{img_model_v0_forward.1} parent=11 // pred_fallthru
          _
        // Predicated region
        $region21: #{img_model_v0_forward.1} parent=11 // pred_check
          %p193 = pneg %p104
        $region22: #{img_model_v0_forward.1} parent=11 // pred_check_branch
          %195 = sbr.rel (%p193) target = $region24
        $region23: #{img_model_v0_forward.1} parent=11 // pred_region
          _
        $region24: #{img_model_v0_forward.1} parent=11 // pred_fallthru
          _
        // Predicated region
        $region25: #{img_model_v0_forward.1} parent=11 // pred_check
          %p196 = pneg %p125
        $region26: #{img_model_v0_forward.1} parent=11 // pred_check_branch
          %198 = sbr.rel (%p196) target = $region28
        $region27: #{img_model_v0_forward.1} parent=11 // pred_region
          _
        $region28: #{img_model_v0_forward.1} parent=11 // pred_fallthru
          _
        // Predicated region
        $region29: #{img_model_v0_forward.1} parent=11 // pred_check
          %p199 = pneg %p146
        $region30: #{img_model_v0_forward.1} parent=11 // pred_check_branch
          %201 = sbr.rel (%p199) target = $region32
        $region31: #{img_model_v0_forward.1} parent=11 // pred_region
          _
        $region32: #{img_model_v0_forward.1} parent=11 // pred_fallthru
          _
      $region12: #{img_model_v0_forward.1} parent=5 // pred_fallthru
        _
      %p202 = scmp.lt.s32.totalorder %s15, 2
      // Predicated region
      $region33: #{img_model_v0_forward.1} parent=5 // pred_check
        %p203 = pneg %p202
      $region34: #{img_model_v0_forward.1} parent=5 // pred_check_branch
        %205 = sbr.rel (%p203) target = $region36
      $region35: #{img_model_v0_forward.1} parent=5 // pred_region
        // Predicated region
        $region37: #{img_model_v0_forward.1} parent=35 // pred_check
          %p206 = pneg %p35
        $region38: #{img_model_v0_forward.1} parent=35 // pred_check_branch
          %208 = sbr.rel (%p206) target = $region40
        $region39: #{img_model_v0_forward.1} parent=35 // pred_region
          %s209 = smul.u32 256, %s15
          %p210 = scmp.lt.s32.totalorder %s209, 511
          %s211 = scalar_select %p210, %s209, 511
          %s212 = smul.addr %s211, 4
          %s213 = scalar_lea.vmem %s0, %s212
          %s214 = smul.u32 256, %s15
        $region40: #{img_model_v0_forward.1} parent=35 // pred_fallthru
          _
      $region36: #{img_model_v0_forward.1} parent=5 // pred_fallthru
        _
      %p215 = scmp.le.s32.totalorder 1, %s15
      %p216 = scmp.lt.s32.totalorder %s15, 3
      %p217 = pnand %p215, %p216
      %p218 = pneg %p217
      // Predicated region
      $region41: #{img_model_v0_forward.1} parent=5 // pred_check
        _
      $region42: #{img_model_v0_forward.1} parent=5 // pred_check_branch
        %220 = sbr.rel (%p217) target = $region44
      $region43: #{img_model_v0_forward.1} parent=5 // pred_region
        %s221 = ssub.s32 %s15, 1
        %s222 = smul.u32 256, %s20
        %p223 = scmp.lt.s32.totalorder %s222, 511
        %s224 = scalar_select %p223, %s222, 511
        %s225 = smul.addr %s224, 4
        %s226 = scalar_lea.vmem %s0, %s225
        %p227 = pneg %p41
        %p228 = pneg %p38
        %p229 = pneg %p62
        %p230 = pneg %p59
        %p231 = pneg %p83
        %p232 = pneg %p80
        %p233 = pneg %p104
        %p234 = pneg %p101
        %p235 = pneg %p125
        %p236 = pneg %p122
        %p237 = pneg %p146
        %p238 = pneg %p143
        %p239 = pneg %p172
        %p240 = pneg %p169
        %s241 = sand.u32 %s159, 1
        %s242 = scalar_lea.sflag [#allocation3], %s241
        %s243 = sand.u32 %s159, 1
        %s244 = smul.addr %s243, 16
        %s245 = scalar_lea.vmem [#allocation2], %s244
        %s246 = smul.u32 256, %s20
        %p247 = scmp.lt.s32.totalorder %s246, 511
        %s248 = scalar_select %p247, %s246, 511
        %s249 = smul.addr %s248, 4
        %s250 = scalar_lea.vmem %s0, %s249
        %s251 = smul.u32 256, %s20
        %v253 = vld [vmem:[%s250] sm:$0xf]
        %v254 = vld [vmem:[%s250 + $0x4] sm:$0xf]
        %v255 = vld [vmem:[%s250 + $0x8] sm:$0xf]
        %v256 = vld [vmem:[%s250 + $0xc] sm:$0xf]
        %v257 = vld [vmem:[%s250 + $0x10] sm:$0xf]
        %v258 = vld [vmem:[%s250 + $0x14] sm:$0xf]
        %v259 = vld [vmem:[%s250 + $0x18] sm:$0xf]
        %v260 = vld [vmem:[%s250 + $0x1c] sm:$0xf]
        %v261 = vld [vmem:[%s250 + $0x20] sm:$0xf]
        %v262 = vld [vmem:[%s250 + $0x24] sm:$0xf]
        %v263 = vld [vmem:[%s250 + $0x28] sm:$0xf]
        %v264 = vld [vmem:[%s250 + $0x2c] sm:$0xf]
        %v265 = vld [vmem:[%s250 + $0x30] sm:$0xf]
        %v266 = vld [vmem:[%s250 + $0x34] sm:$0xf]
        %v267 = vld [vmem:[%s250 + $0x38] sm:$0xf]
        %v268 = vld [vmem:[%s250 + $0x3c] sm:$0xf]
        %v269 = vld [vmem:[%s250 + $0x40] sm:$0xf]
        %v270 = vld [vmem:[%s250 + $0x44] sm:$0xf]
        %v271 = vld [vmem:[%s250 + $0x48] sm:$0xf]
        %v272 = vld [vmem:[%s250 + $0x4c] sm:$0xf]
        %v273 = vld [vmem:[%s250 + $0x50] sm:$0xf]
        %v274 = vld [vmem:[%s250 + $0x54] sm:$0xf]
        %v275 = vld [vmem:[%s250 + $0x58] sm:$0xf]
        %v276 = vld [vmem:[%s250 + $0x5c] sm:$0xf]
        %v277 = vld [vmem:[%s250 + $0x60] sm:$0xf]
        %v278 = vld [vmem:[%s250 + $0x64] sm:$0xf]
        %v279 = vld [vmem:[%s250 + $0x68] sm:$0xf]
        %v280 = vld [vmem:[%s250 + $0x6c] sm:$0xf]
        %v281 = vld [vmem:[%s250 + $0x70] sm:$0xf]
        %v282 = vld [vmem:[%s250 + $0x74] sm:$0xf]
        %v283 = vld [vmem:[%s250 + $0x78] sm:$0xf]
        %v284 = vld [vmem:[%s250 + $0x7c] sm:$0xf]
        %v285 = vld [vmem:[%s250 + $0x80] sm:$0xf]
        %v286 = vld [vmem:[%s250 + $0x84] sm:$0xf]
        %v287 = vld [vmem:[%s250 + $0x88] sm:$0xf]
        %v288 = vld [vmem:[%s250 + $0x8c] sm:$0xf]
        %v289 = vld [vmem:[%s250 + $0x90] sm:$0xf]
        %v290 = vld [vmem:[%s250 + $0x94] sm:$0xf]
        %v291 = vld [vmem:[%s250 + $0x98] sm:$0xf]
        %v292 = vld [vmem:[%s250 + $0x9c] sm:$0xf]
        %v293 = vld [vmem:[%s250 + $0xa0] sm:$0xf]
        %v294 = vld [vmem:[%s250 + $0xa4] sm:$0xf]
        %v295 = vld [vmem:[%s250 + $0xa8] sm:$0xf]
        %v296 = vld [vmem:[%s250 + $0xac] sm:$0xf]
        %v297 = vld [vmem:[%s250 + $0xb0] sm:$0xf]
        %v298 = vld [vmem:[%s250 + $0xb4] sm:$0xf]
        %v299 = vld [vmem:[%s250 + $0xb8] sm:$0xf]
        %v300 = vld [vmem:[%s250 + $0xbc] sm:$0xf]
        %v301 = vld [vmem:[%s250 + $0xc0] sm:$0xf]
        %v302 = vld [vmem:[%s250 + $0xc4] sm:$0xf]
        %v303 = vld [vmem:[%s250 + $0xc8] sm:$0xf]
        %v304 = vld [vmem:[%s250 + $0xcc] sm:$0xf]
        %v305 = vld [vmem:[%s250 + $0xd0] sm:$0xf]
        %v306 = vld [vmem:[%s250 + $0xd4] sm:$0xf]
        %v307 = vld [vmem:[%s250 + $0xd8] sm:$0xf]
        %v308 = vld [vmem:[%s250 + $0xdc] sm:$0xf]
        %v309 = vld [vmem:[%s250 + $0xe0] sm:$0xf]
        %v310 = vld [vmem:[%s250 + $0xe4] sm:$0xf]
        %v311 = vld [vmem:[%s250 + $0xe8] sm:$0xf]
        %v312 = vld [vmem:[%s250 + $0xec] sm:$0xf]
        %v313 = vld [vmem:[%s250 + $0xf0] sm:$0xf]
        %v314 = vld [vmem:[%s250 + $0xf4] sm:$0xf]
        %v315 = vld [vmem:[%s250 + $0xf8] sm:$0xf]
        %v316 = vld [vmem:[%s250 + $0xfc] sm:$0xf]
        %v317 = vld [vmem:[%s250 + $0x100] sm:$0xf]
        %v318 = vld [vmem:[%s250 + $0x104] sm:$0xf]
        %v319 = vld [vmem:[%s250 + $0x108] sm:$0xf]
        %v320 = vld [vmem:[%s250 + $0x10c] sm:$0xf]
        %v321 = vld [vmem:[%s250 + $0x110] sm:$0xf]
        %v322 = vld [vmem:[%s250 + $0x114] sm:$0xf]
        %v323 = vld [vmem:[%s250 + $0x118] sm:$0xf]
        %v324 = vld [vmem:[%s250 + $0x11c] sm:$0xf]
        %v325 = vld [vmem:[%s250 + $0x120] sm:$0xf]
        %v326 = vld [vmem:[%s250 + $0x124] sm:$0xf]
        %v327 = vld [vmem:[%s250 + $0x128] sm:$0xf]
        %v328 = vld [vmem:[%s250 + $0x12c] sm:$0xf]
        %v329 = vld [vmem:[%s250 + $0x130] sm:$0xf]
        %v330 = vld [vmem:[%s250 + $0x134] sm:$0xf]
        %v331 = vld [vmem:[%s250 + $0x138] sm:$0xf]
        %v332 = vld [vmem:[%s250 + $0x13c] sm:$0xf]
        %v333 = vld [vmem:[%s250 + $0x140] sm:$0xf]
        %v334 = vld [vmem:[%s250 + $0x144] sm:$0xf]
        %v335 = vld [vmem:[%s250 + $0x148] sm:$0xf]
        %v336 = vld [vmem:[%s250 + $0x14c] sm:$0xf]
        %v337 = vld [vmem:[%s250 + $0x150] sm:$0xf]
        %v338 = vld [vmem:[%s250 + $0x154] sm:$0xf]
        %v339 = vld [vmem:[%s250 + $0x158] sm:$0xf]
        %v340 = vld [vmem:[%s250 + $0x15c] sm:$0xf]
        %v341 = vld [vmem:[%s250 + $0x160] sm:$0xf]
        %v342 = vld [vmem:[%s250 + $0x164] sm:$0xf]
        %v343 = vld [vmem:[%s250 + $0x168] sm:$0xf]
        %v344 = vld [vmem:[%s250 + $0x16c] sm:$0xf]
        %v345 = vld [vmem:[%s250 + $0x170] sm:$0xf]
        %v346 = vld [vmem:[%s250 + $0x174] sm:$0xf]
        %v347 = vld [vmem:[%s250 + $0x178] sm:$0xf]
        %v348 = vld [vmem:[%s250 + $0x17c] sm:$0xf]
        %v349 = vld [vmem:[%s250 + $0x180] sm:$0xf]
        %v350 = vld [vmem:[%s250 + $0x184] sm:$0xf]
        %v351 = vld [vmem:[%s250 + $0x188] sm:$0xf]
        %v352 = vld [vmem:[%s250 + $0x18c] sm:$0xf]
        %v353 = vld [vmem:[%s250 + $0x190] sm:$0xf]
        %v354 = vld [vmem:[%s250 + $0x194] sm:$0xf]
        %v355 = vld [vmem:[%s250 + $0x198] sm:$0xf]
        %v356 = vld [vmem:[%s250 + $0x19c] sm:$0xf]
        %v357 = vld [vmem:[%s250 + $0x1a0] sm:$0xf]
        %v358 = vld [vmem:[%s250 + $0x1a4] sm:$0xf]
        %v359 = vld [vmem:[%s250 + $0x1a8] sm:$0xf]
        %v360 = vld [vmem:[%s250 + $0x1ac] sm:$0xf]
        %v361 = vld [vmem:[%s250 + $0x1b0] sm:$0xf]
        %v362 = vld [vmem:[%s250 + $0x1b4] sm:$0xf]
        %v363 = vld [vmem:[%s250 + $0x1b8] sm:$0xf]
        %v364 = vld [vmem:[%s250 + $0x1bc] sm:$0xf]
        %v365 = vld [vmem:[%s250 + $0x1c0] sm:$0xf]
        %v366 = vld [vmem:[%s250 + $0x1c4] sm:$0xf]
        %v367 = vld [vmem:[%s250 + $0x1c8] sm:$0xf]
        %v368 = vld [vmem:[%s250 + $0x1cc] sm:$0xf]
        %v369 = vld [vmem:[%s250 + $0x1d0] sm:$0xf]
        %v370 = vld [vmem:[%s250 + $0x1d4] sm:$0xf]
        %v371 = vld [vmem:[%s250 + $0x1d8] sm:$0xf]
        %v372 = vld [vmem:[%s250 + $0x1dc] sm:$0xf]
        %v373 = vld [vmem:[%s250 + $0x1e0] sm:$0xf]
        %v374 = vld [vmem:[%s250 + $0x1e4] sm:$0xf]
        %v375 = vld [vmem:[%s250 + $0x1e8] sm:$0xf]
        %v376 = vld [vmem:[%s250 + $0x1ec] sm:$0xf]
        %v377 = vld [vmem:[%s250 + $0x1f0] sm:$0xf]
        %v378 = vld [vmem:[%s250 + $0x1f4] sm:$0xf]
        %v379 = vld [vmem:[%s250 + $0x1f8] sm:$0xf]
        %v380 = vld [vmem:[%s250 + $0x1fc] sm:$0xf]
        %v381 = vld [vmem:[%s250 + $0x200] sm:$0xf]
        %v382 = vld [vmem:[%s250 + $0x204] sm:$0xf]
        %v383 = vld [vmem:[%s250 + $0x208] sm:$0xf]
        %v384 = vld [vmem:[%s250 + $0x20c] sm:$0xf]
        %v385 = vld [vmem:[%s250 + $0x210] sm:$0xf]
        %v386 = vld [vmem:[%s250 + $0x214] sm:$0xf]
        %v387 = vld [vmem:[%s250 + $0x218] sm:$0xf]
        %v388 = vld [vmem:[%s250 + $0x21c] sm:$0xf]
        %v389 = vld [vmem:[%s250 + $0x220] sm:$0xf]
        %v390 = vld [vmem:[%s250 + $0x224] sm:$0xf]
        %v391 = vld [vmem:[%s250 + $0x228] sm:$0xf]
        %v392 = vld [vmem:[%s250 + $0x22c] sm:$0xf]
        %v393 = vld [vmem:[%s250 + $0x230] sm:$0xf]
        %v394 = vld [vmem:[%s250 + $0x234] sm:$0xf]
        %v395 = vld [vmem:[%s250 + $0x238] sm:$0xf]
        %v396 = vld [vmem:[%s250 + $0x23c] sm:$0xf]
        %v397 = vld [vmem:[%s250 + $0x240] sm:$0xf]
        %v398 = vld [vmem:[%s250 + $0x244] sm:$0xf]
        %v399 = vld [vmem:[%s250 + $0x248] sm:$0xf]
        %v400 = vld [vmem:[%s250 + $0x24c] sm:$0xf]
        %v401 = vld [vmem:[%s250 + $0x250] sm:$0xf]
        %v402 = vld [vmem:[%s250 + $0x254] sm:$0xf]
        %v403 = vld [vmem:[%s250 + $0x258] sm:$0xf]
        %v404 = vld [vmem:[%s250 + $0x25c] sm:$0xf]
        %v405 = vld [vmem:[%s250 + $0x260] sm:$0xf]
        %v406 = vld [vmem:[%s250 + $0x264] sm:$0xf]
        %v407 = vld [vmem:[%s250 + $0x268] sm:$0xf]
        %v408 = vld [vmem:[%s250 + $0x26c] sm:$0xf]
        %v409 = vld [vmem:[%s250 + $0x270] sm:$0xf]
        %v410 = vld [vmem:[%s250 + $0x274] sm:$0xf]
        %v411 = vld [vmem:[%s250 + $0x278] sm:$0xf]
        %v412 = vld [vmem:[%s250 + $0x27c] sm:$0xf]
        %v413 = vld [vmem:[%s250 + $0x280] sm:$0xf]
        %v414 = vld [vmem:[%s250 + $0x284] sm:$0xf]
        %v415 = vld [vmem:[%s250 + $0x288] sm:$0xf]
        %v416 = vld [vmem:[%s250 + $0x28c] sm:$0xf]
        %v417 = vld [vmem:[%s250 + $0x290] sm:$0xf]
        %v418 = vld [vmem:[%s250 + $0x294] sm:$0xf]
        %v419 = vld [vmem:[%s250 + $0x298] sm:$0xf]
        %v420 = vld [vmem:[%s250 + $0x29c] sm:$0xf]
        %v421 = vld [vmem:[%s250 + $0x2a0] sm:$0xf]
        %v422 = vld [vmem:[%s250 + $0x2a4] sm:$0xf]
        %v423 = vld [vmem:[%s250 + $0x2a8] sm:$0xf]
        %v424 = vld [vmem:[%s250 + $0x2ac] sm:$0xf]
        %v425 = vld [vmem:[%s250 + $0x2b0] sm:$0xf]
        %v426 = vld [vmem:[%s250 + $0x2b4] sm:$0xf]
        %v427 = vld [vmem:[%s250 + $0x2b8] sm:$0xf]
        %v428 = vld [vmem:[%s250 + $0x2bc] sm:$0xf]
        %v429 = vld [vmem:[%s250 + $0x2c0] sm:$0xf]
        %v430 = vld [vmem:[%s250 + $0x2c4] sm:$0xf]
        %v431 = vld [vmem:[%s250 + $0x2c8] sm:$0xf]
        %v432 = vld [vmem:[%s250 + $0x2cc] sm:$0xf]
        %v433 = vld [vmem:[%s250 + $0x2d0] sm:$0xf]
        %v434 = vld [vmem:[%s250 + $0x2d4] sm:$0xf]
        %v435 = vld [vmem:[%s250 + $0x2d8] sm:$0xf]
        %v436 = vld [vmem:[%s250 + $0x2dc] sm:$0xf]
        %v437 = vld [vmem:[%s250 + $0x2e0] sm:$0xf]
        %v438 = vld [vmem:[%s250 + $0x2e4] sm:$0xf]
        %v439 = vld [vmem:[%s250 + $0x2e8] sm:$0xf]
        %v440 = vld [vmem:[%s250 + $0x2ec] sm:$0xf]
        %v441 = vld [vmem:[%s250 + $0x2f0] sm:$0xf]
        %v442 = vld [vmem:[%s250 + $0x2f4] sm:$0xf]
        %v443 = vld [vmem:[%s250 + $0x2f8] sm:$0xf]
        %v444 = vld [vmem:[%s250 + $0x2fc] sm:$0xf]
        %v445 = vld [vmem:[%s250 + $0x300] sm:$0xf]
        %v446 = vld [vmem:[%s250 + $0x304] sm:$0xf]
        %v447 = vld [vmem:[%s250 + $0x308] sm:$0xf]
        %v448 = vld [vmem:[%s250 + $0x30c] sm:$0xf]
        %v449 = vld [vmem:[%s250 + $0x310] sm:$0xf]
        %v450 = vld [vmem:[%s250 + $0x314] sm:$0xf]
        %v451 = vld [vmem:[%s250 + $0x318] sm:$0xf]
        %v452 = vld [vmem:[%s250 + $0x31c] sm:$0xf]
        %v453 = vld [vmem:[%s250 + $0x320] sm:$0xf]
        %v454 = vld [vmem:[%s250 + $0x324] sm:$0xf]
        %v455 = vld [vmem:[%s250 + $0x328] sm:$0xf]
        %v456 = vld [vmem:[%s250 + $0x32c] sm:$0xf]
        %v457 = vld [vmem:[%s250 + $0x330] sm:$0xf]
        %v458 = vld [vmem:[%s250 + $0x334] sm:$0xf]
        %v459 = vld [vmem:[%s250 + $0x338] sm:$0xf]
        %v460 = vld [vmem:[%s250 + $0x33c] sm:$0xf]
        %v461 = vld [vmem:[%s250 + $0x340] sm:$0xf]
        %v462 = vld [vmem:[%s250 + $0x344] sm:$0xf]
        %v463 = vld [vmem:[%s250 + $0x348] sm:$0xf]
        %v464 = vld [vmem:[%s250 + $0x34c] sm:$0xf]
        %v465 = vld [vmem:[%s250 + $0x350] sm:$0xf]
        %v466 = vld [vmem:[%s250 + $0x354] sm:$0xf]
        %v467 = vld [vmem:[%s250 + $0x358] sm:$0xf]
        %v468 = vld [vmem:[%s250 + $0x35c] sm:$0xf]
        %v469 = vld [vmem:[%s250 + $0x360] sm:$0xf]
        %v470 = vld [vmem:[%s250 + $0x364] sm:$0xf]
        %v471 = vld [vmem:[%s250 + $0x368] sm:$0xf]
        %v472 = vld [vmem:[%s250 + $0x36c] sm:$0xf]
        %v473 = vld [vmem:[%s250 + $0x370] sm:$0xf]
        %v474 = vld [vmem:[%s250 + $0x374] sm:$0xf]
        %v475 = vld [vmem:[%s250 + $0x378] sm:$0xf]
        %v476 = vld [vmem:[%s250 + $0x37c] sm:$0xf]
        %v477 = vld [vmem:[%s250 + $0x380] sm:$0xf]
        %v478 = vld [vmem:[%s250 + $0x384] sm:$0xf]
        %v479 = vld [vmem:[%s250 + $0x388] sm:$0xf]
        %v480 = vld [vmem:[%s250 + $0x38c] sm:$0xf]
        %v481 = vld [vmem:[%s250 + $0x390] sm:$0xf]
        %v482 = vld [vmem:[%s250 + $0x394] sm:$0xf]
        %v483 = vld [vmem:[%s250 + $0x398] sm:$0xf]
        %v484 = vld [vmem:[%s250 + $0x39c] sm:$0xf]
        %v485 = vld [vmem:[%s250 + $0x3a0] sm:$0xf]
        %v486 = vld [vmem:[%s250 + $0x3a4] sm:$0xf]
        %v487 = vld [vmem:[%s250 + $0x3a8] sm:$0xf]
        %v488 = vld [vmem:[%s250 + $0x3ac] sm:$0xf]
        %v489 = vld [vmem:[%s250 + $0x3b0] sm:$0xf]
        %v490 = vld [vmem:[%s250 + $0x3b4] sm:$0xf]
        %v491 = vld [vmem:[%s250 + $0x3b8] sm:$0xf]
        %v492 = vld [vmem:[%s250 + $0x3bc] sm:$0xf]
        %v493 = vld [vmem:[%s250 + $0x3c0] sm:$0xf]
        %v494 = vld [vmem:[%s250 + $0x3c4] sm:$0xf]
        %v495 = vld [vmem:[%s250 + $0x3c8] sm:$0xf]
        %v496 = vld [vmem:[%s250 + $0x3cc] sm:$0xf]
        %v497 = vld [vmem:[%s250 + $0x3d0] sm:$0xf]
        %v498 = vld [vmem:[%s250 + $0x3d4] sm:$0xf]
        %v499 = vld [vmem:[%s250 + $0x3d8] sm:$0xf]
        %v500 = vld [vmem:[%s250 + $0x3dc] sm:$0xf]
        %v501 = vld [vmem:[%s250 + $0x3e0] sm:$0xf]
        %v502 = vld [vmem:[%s250 + $0x3e4] sm:$0xf]
        %v503 = vld [vmem:[%s250 + $0x3e8] sm:$0xf]
        %v504 = vld [vmem:[%s250 + $0x3ec] sm:$0xf]
        %v505 = vld [vmem:[%s250 + $0x3f0] sm:$0xf]
        %v506 = vld [vmem:[%s250 + $0x3f4] sm:$0xf]
        %v507 = vld [vmem:[%s250 + $0x3f8] sm:$0xf]
        %v508 = vld [vmem:[%s250 + $0x3fc] sm:$0xf]
        %v509 = vld [vmem:[%s2] sm:$0xf]
        %v510 = vld [vmem:[%s2 + $0x4] sm:$0xf]
        %v511 = vld [vmem:[%s2 + $0x8] sm:$0xf]
        %v512 = vld [vmem:[%s2 + $0xc] sm:$0xf]
        %v513 = vld [vmem:[%s3] sm:$0x1]
        %v515 = vperm.slane %v513, 0
        %v773 = vunpack.c.l.b16 %v253
        %v774 = vunpack.c.l.b16 %v254
        %v775 = vunpack.c.l.b16 %v255
        %v776 = vunpack.c.l.b16 %v256
        %v777 = vunpack.c.l.b16 %v257
        %v778 = vunpack.c.l.b16 %v258
        %v779 = vunpack.c.l.b16 %v259
        %v780 = vunpack.c.l.b16 %v260
        %v781 = vunpack.c.l.b16 %v261
        %v782 = vunpack.c.l.b16 %v262
        %v783 = vunpack.c.l.b16 %v263
        %v784 = vunpack.c.l.b16 %v264
        %v785 = vunpack.c.l.b16 %v265
        %v786 = vunpack.c.l.b16 %v266
        %v787 = vunpack.c.l.b16 %v267
        %v788 = vunpack.c.l.b16 %v268
        %v789 = vunpack.c.l.b16 %v269
        %v790 = vunpack.c.l.b16 %v270
        %v791 = vunpack.c.l.b16 %v271
        %v792 = vunpack.c.l.b16 %v272
        %v793 = vunpack.c.l.b16 %v273
        %v794 = vunpack.c.l.b16 %v274
        %v795 = vunpack.c.l.b16 %v275
        %v796 = vunpack.c.l.b16 %v276
        %v797 = vunpack.c.l.b16 %v277
        %v798 = vunpack.c.l.b16 %v278
        %v799 = vunpack.c.l.b16 %v279
        %v800 = vunpack.c.l.b16 %v280
        %v801 = vunpack.c.l.b16 %v281
        %v802 = vunpack.c.l.b16 %v282
        %v803 = vunpack.c.l.b16 %v283
        %v804 = vunpack.c.l.b16 %v284
        %v805 = vunpack.c.l.b16 %v285
        %v806 = vunpack.c.l.b16 %v286
        %v807 = vunpack.c.l.b16 %v287
        %v808 = vunpack.c.l.b16 %v288
        %v809 = vunpack.c.l.b16 %v289
        %v810 = vunpack.c.l.b16 %v290
        %v811 = vunpack.c.l.b16 %v291
        %v812 = vunpack.c.l.b16 %v292
        %v813 = vunpack.c.l.b16 %v293
        %v814 = vunpack.c.l.b16 %v294
        %v815 = vunpack.c.l.b16 %v295
        %v816 = vunpack.c.l.b16 %v296
        %v817 = vunpack.c.l.b16 %v297
        %v818 = vunpack.c.l.b16 %v298
        %v819 = vunpack.c.l.b16 %v299
        %v820 = vunpack.c.l.b16 %v300
        %v821 = vunpack.c.l.b16 %v301
        %v822 = vunpack.c.l.b16 %v302
        %v823 = vunpack.c.l.b16 %v303
        %v824 = vunpack.c.l.b16 %v304
        %v825 = vunpack.c.l.b16 %v305
        %v826 = vunpack.c.l.b16 %v306
        %v827 = vunpack.c.l.b16 %v307
        %v828 = vunpack.c.l.b16 %v308
        %v829 = vunpack.c.l.b16 %v309
        %v830 = vunpack.c.l.b16 %v310
        %v831 = vunpack.c.l.b16 %v311
        %v832 = vunpack.c.l.b16 %v312
        %v833 = vunpack.c.l.b16 %v313
        %v834 = vunpack.c.l.b16 %v314
        %v835 = vunpack.c.l.b16 %v315
        %v836 = vunpack.c.l.b16 %v316
        %v837 = vunpack.c.l.b16 %v317
        %v838 = vunpack.c.l.b16 %v318
        %v839 = vunpack.c.l.b16 %v319
        %v840 = vunpack.c.l.b16 %v320
        %v841 = vunpack.c.l.b16 %v321
        %v842 = vunpack.c.l.b16 %v322
        %v843 = vunpack.c.l.b16 %v323
        %v844 = vunpack.c.l.b16 %v324
        %v845 = vunpack.c.l.b16 %v325
        %v846 = vunpack.c.l.b16 %v326
        %v847 = vunpack.c.l.b16 %v327
        %v848 = vunpack.c.l.b16 %v328
        %v849 = vunpack.c.l.b16 %v329
        %v850 = vunpack.c.l.b16 %v330
        %v851 = vunpack.c.l.b16 %v331
        %v852 = vunpack.c.l.b16 %v332
        %v853 = vunpack.c.l.b16 %v333
        %v854 = vunpack.c.l.b16 %v334
        %v855 = vunpack.c.l.b16 %v335
        %v856 = vunpack.c.l.b16 %v336
        %v857 = vunpack.c.l.b16 %v337
        %v858 = vunpack.c.l.b16 %v338
        %v859 = vunpack.c.l.b16 %v339
        %v860 = vunpack.c.l.b16 %v340
        %v861 = vunpack.c.l.b16 %v341
        %v862 = vunpack.c.l.b16 %v342
        %v863 = vunpack.c.l.b16 %v343
        %v864 = vunpack.c.l.b16 %v344
        %v865 = vunpack.c.l.b16 %v345
        %v866 = vunpack.c.l.b16 %v346
        %v867 = vunpack.c.l.b16 %v347
        %v868 = vunpack.c.l.b16 %v348
        %v869 = vunpack.c.l.b16 %v349
        %v870 = vunpack.c.l.b16 %v350
        %v871 = vunpack.c.l.b16 %v351
        %v872 = vunpack.c.l.b16 %v352
        %v873 = vunpack.c.l.b16 %v353
        %v874 = vunpack.c.l.b16 %v354
        %v875 = vunpack.c.l.b16 %v355
        %v876 = vunpack.c.l.b16 %v356
        %v877 = vunpack.c.l.b16 %v357
        %v878 = vunpack.c.l.b16 %v358
        %v879 = vunpack.c.l.b16 %v359
        %v880 = vunpack.c.l.b16 %v360
        %v881 = vunpack.c.l.b16 %v361
        %v882 = vunpack.c.l.b16 %v362
        %v883 = vunpack.c.l.b16 %v363
        %v884 = vunpack.c.l.b16 %v364
        %v885 = vunpack.c.l.b16 %v365
        %v886 = vunpack.c.l.b16 %v366
        %v887 = vunpack.c.l.b16 %v367
        %v888 = vunpack.c.l.b16 %v368
        %v889 = vunpack.c.l.b16 %v369
        %v890 = vunpack.c.l.b16 %v370
        %v891 = vunpack.c.l.b16 %v371
        %v892 = vunpack.c.l.b16 %v372
        %v893 = vunpack.c.l.b16 %v373
        %v894 = vunpack.c.l.b16 %v374
        %v895 = vunpack.c.l.b16 %v375
        %v896 = vunpack.c.l.b16 %v376
        %v897 = vunpack.c.l.b16 %v377
        %v898 = vunpack.c.l.b16 %v378
        %v899 = vunpack.c.l.b16 %v379
        %v900 = vunpack.c.l.b16 %v380
        %v901 = vunpack.c.l.b16 %v381
        %v902 = vunpack.c.l.b16 %v382
        %v903 = vunpack.c.l.b16 %v383
        %v904 = vunpack.c.l.b16 %v384
        %v905 = vunpack.c.l.b16 %v385
        %v906 = vunpack.c.l.b16 %v386
        %v907 = vunpack.c.l.b16 %v387
        %v908 = vunpack.c.l.b16 %v388
        %v909 = vunpack.c.l.b16 %v389
        %v910 = vunpack.c.l.b16 %v390
        %v911 = vunpack.c.l.b16 %v391
        %v912 = vunpack.c.l.b16 %v392
        %v913 = vunpack.c.l.b16 %v393
        %v914 = vunpack.c.l.b16 %v394
        %v915 = vunpack.c.l.b16 %v395
        %v916 = vunpack.c.l.b16 %v396
        %v917 = vunpack.c.l.b16 %v397
        %v918 = vunpack.c.l.b16 %v398
        %v919 = vunpack.c.l.b16 %v399
        %v920 = vunpack.c.l.b16 %v400
        %v921 = vunpack.c.l.b16 %v401
        %v922 = vunpack.c.l.b16 %v402
        %v923 = vunpack.c.l.b16 %v403
        %v924 = vunpack.c.l.b16 %v404
        %v925 = vunpack.c.l.b16 %v405
        %v926 = vunpack.c.l.b16 %v406
        %v927 = vunpack.c.l.b16 %v407
        %v928 = vunpack.c.l.b16 %v408
        %v929 = vunpack.c.l.b16 %v409
        %v930 = vunpack.c.l.b16 %v410
        %v931 = vunpack.c.l.b16 %v411
        %v932 = vunpack.c.l.b16 %v412
        %v933 = vunpack.c.l.b16 %v413
        %v934 = vunpack.c.l.b16 %v414
        %v935 = vunpack.c.l.b16 %v415
        %v936 = vunpack.c.l.b16 %v416
        %v937 = vunpack.c.l.b16 %v417
        %v938 = vunpack.c.l.b16 %v418
        %v939 = vunpack.c.l.b16 %v419
        %v940 = vunpack.c.l.b16 %v420
        %v941 = vunpack.c.l.b16 %v421
        %v942 = vunpack.c.l.b16 %v422
        %v943 = vunpack.c.l.b16 %v423
        %v944 = vunpack.c.l.b16 %v424
        %v945 = vunpack.c.l.b16 %v425
        %v946 = vunpack.c.l.b16 %v426
        %v947 = vunpack.c.l.b16 %v427
        %v948 = vunpack.c.l.b16 %v428
        %v949 = vunpack.c.l.b16 %v429
        %v950 = vunpack.c.l.b16 %v430
        %v951 = vunpack.c.l.b16 %v431
        %v952 = vunpack.c.l.b16 %v432
        %v953 = vunpack.c.l.b16 %v433
        %v954 = vunpack.c.l.b16 %v434
        %v955 = vunpack.c.l.b16 %v435
        %v956 = vunpack.c.l.b16 %v436
        %v957 = vunpack.c.l.b16 %v437
        %v958 = vunpack.c.l.b16 %v438
        %v959 = vunpack.c.l.b16 %v439
        %v960 = vunpack.c.l.b16 %v440
        %v961 = vunpack.c.l.b16 %v441
        %v962 = vunpack.c.l.b16 %v442
        %v963 = vunpack.c.l.b16 %v443
        %v964 = vunpack.c.l.b16 %v444
        %v965 = vunpack.c.l.b16 %v445
        %v966 = vunpack.c.l.b16 %v446
        %v967 = vunpack.c.l.b16 %v447
        %v968 = vunpack.c.l.b16 %v448
        %v969 = vunpack.c.l.b16 %v449
        %v970 = vunpack.c.l.b16 %v450
        %v971 = vunpack.c.l.b16 %v451
        %v972 = vunpack.c.l.b16 %v452
        %v973 = vunpack.c.l.b16 %v453
        %v974 = vunpack.c.l.b16 %v454
        %v975 = vunpack.c.l.b16 %v455
        %v976 = vunpack.c.l.b16 %v456
        %v977 = vunpack.c.l.b16 %v457
        %v978 = vunpack.c.l.b16 %v458
        %v979 = vunpack.c.l.b16 %v459
        %v980 = vunpack.c.l.b16 %v460
        %v981 = vunpack.c.l.b16 %v461
        %v982 = vunpack.c.l.b16 %v462
        %v983 = vunpack.c.l.b16 %v463
        %v984 = vunpack.c.l.b16 %v464
        %v985 = vunpack.c.l.b16 %v465
        %v986 = vunpack.c.l.b16 %v466
        %v987 = vunpack.c.l.b16 %v467
        %v988 = vunpack.c.l.b16 %v468
        %v989 = vunpack.c.l.b16 %v469
        %v990 = vunpack.c.l.b16 %v470
        %v991 = vunpack.c.l.b16 %v471
        %v992 = vunpack.c.l.b16 %v472
        %v993 = vunpack.c.l.b16 %v473
        %v994 = vunpack.c.l.b16 %v474
        %v995 = vunpack.c.l.b16 %v475
        %v996 = vunpack.c.l.b16 %v476
        %v997 = vunpack.c.l.b16 %v477
        %v998 = vunpack.c.l.b16 %v478
        %v999 = vunpack.c.l.b16 %v479
        %v1000 = vunpack.c.l.b16 %v480
        %v1001 = vunpack.c.l.b16 %v481
        %v1002 = vunpack.c.l.b16 %v482
        %v1003 = vunpack.c.l.b16 %v483
        %v1004 = vunpack.c.l.b16 %v484
        %v1005 = vunpack.c.l.b16 %v485
        %v1006 = vunpack.c.l.b16 %v486
        %v1007 = vunpack.c.l.b16 %v487
        %v1008 = vunpack.c.l.b16 %v488
        %v1009 = vunpack.c.l.b16 %v489
        %v1010 = vunpack.c.l.b16 %v490
        %v1011 = vunpack.c.l.b16 %v491
        %v1012 = vunpack.c.l.b16 %v492
        %v1013 = vunpack.c.l.b16 %v493
        %v1014 = vunpack.c.l.b16 %v494
        %v1015 = vunpack.c.l.b16 %v495
        %v1016 = vunpack.c.l.b16 %v496
        %v1017 = vunpack.c.l.b16 %v497
        %v1018 = vunpack.c.l.b16 %v498
        %v1019 = vunpack.c.l.b16 %v499
        %v1020 = vunpack.c.l.b16 %v500
        %v1021 = vunpack.c.l.b16 %v501
        %v1022 = vunpack.c.l.b16 %v502
        %v1023 = vunpack.c.l.b16 %v503
        %v1024 = vunpack.c.l.b16 %v504
        %v1025 = vunpack.c.l.b16 %v505
        %v1026 = vunpack.c.l.b16 %v506
        %v1027 = vunpack.c.l.b16 %v507
        %v1028 = vunpack.c.l.b16 %v508
        %v1029 = vpack.c.b16 %v774, %v773
        %v1030 = vpack.c.b16 %v776, %v775
        %v1031 = vpack.c.b16 %v778, %v777
        %v1032 = vpack.c.b16 %v780, %v779
        %v1033 = vpack.c.b16 %v782, %v781
        %v1034 = vpack.c.b16 %v784, %v783
        %v1035 = vpack.c.b16 %v786, %v785
        %v1036 = vpack.c.b16 %v788, %v787
        %v1037 = vpack.c.b16 %v790, %v789
        %v1038 = vpack.c.b16 %v792, %v791
        %v1039 = vpack.c.b16 %v794, %v793
        %v1040 = vpack.c.b16 %v796, %v795
        %v1041 = vpack.c.b16 %v798, %v797
        %v1042 = vpack.c.b16 %v800, %v799
        %v1043 = vpack.c.b16 %v802, %v801
        %v1044 = vpack.c.b16 %v804, %v803
        %v1045 = vpack.c.b16 %v806, %v805
        %v1046 = vpack.c.b16 %v808, %v807
        %v1047 = vpack.c.b16 %v810, %v809
        %v1048 = vpack.c.b16 %v812, %v811
        %v1049 = vpack.c.b16 %v814, %v813
        %v1050 = vpack.c.b16 %v816, %v815
        %v1051 = vpack.c.b16 %v818, %v817
        %v1052 = vpack.c.b16 %v820, %v819
        %v1053 = vpack.c.b16 %v822, %v821
        %v1054 = vpack.c.b16 %v824, %v823
        %v1055 = vpack.c.b16 %v826, %v825
        %v1056 = vpack.c.b16 %v828, %v827
        %v1057 = vpack.c.b16 %v830, %v829
        %v1058 = vpack.c.b16 %v832, %v831
        %v1059 = vpack.c.b16 %v834, %v833
        %v1060 = vpack.c.b16 %v836, %v835
        %v1061 = vpack.c.b16 %v838, %v837
        %v1062 = vpack.c.b16 %v840, %v839
        %v1063 = vpack.c.b16 %v842, %v841
        %v1064 = vpack.c.b16 %v844, %v843
        %v1065 = vpack.c.b16 %v846, %v845
        %v1066 = vpack.c.b16 %v848, %v847
        %v1067 = vpack.c.b16 %v850, %v849
        %v1068 = vpack.c.b16 %v852, %v851
        %v1069 = vpack.c.b16 %v854, %v853
        %v1070 = vpack.c.b16 %v856, %v855
        %v1071 = vpack.c.b16 %v858, %v857
        %v1072 = vpack.c.b16 %v860, %v859
        %v1073 = vpack.c.b16 %v862, %v861
        %v1074 = vpack.c.b16 %v864, %v863
        %v1075 = vpack.c.b16 %v866, %v865
        %v1076 = vpack.c.b16 %v868, %v867
        %v1077 = vpack.c.b16 %v870, %v869
        %v1078 = vpack.c.b16 %v872, %v871
        %v1079 = vpack.c.b16 %v874, %v873
        %v1080 = vpack.c.b16 %v876, %v875
        %v1081 = vpack.c.b16 %v878, %v877
        %v1082 = vpack.c.b16 %v880, %v879
        %v1083 = vpack.c.b16 %v882, %v881
        %v1084 = vpack.c.b16 %v884, %v883
        %v1085 = vpack.c.b16 %v886, %v885
        %v1086 = vpack.c.b16 %v888, %v887
        %v1087 = vpack.c.b16 %v890, %v889
        %v1088 = vpack.c.b16 %v892, %v891
        %v1089 = vpack.c.b16 %v894, %v893
        %v1090 = vpack.c.b16 %v896, %v895
        %v1091 = vpack.c.b16 %v898, %v897
        %v1092 = vpack.c.b16 %v900, %v899
        %v1093 = vpack.c.b16 %v902, %v901
        %v1094 = vpack.c.b16 %v904, %v903
        %v1095 = vpack.c.b16 %v906, %v905
        %v1096 = vpack.c.b16 %v908, %v907
        %v1097 = vpack.c.b16 %v910, %v909
        %v1098 = vpack.c.b16 %v912, %v911
        %v1099 = vpack.c.b16 %v914, %v913
        %v1100 = vpack.c.b16 %v916, %v915
        %v1101 = vpack.c.b16 %v918, %v917
        %v1102 = vpack.c.b16 %v920, %v919
        %v1103 = vpack.c.b16 %v922, %v921
        %v1104 = vpack.c.b16 %v924, %v923
        %v1105 = vpack.c.b16 %v926, %v925
        %v1106 = vpack.c.b16 %v928, %v927
        %v1107 = vpack.c.b16 %v930, %v929
        %v1108 = vpack.c.b16 %v932, %v931
        %v1109 = vpack.c.b16 %v934, %v933
        %v1110 = vpack.c.b16 %v936, %v935
        %v1111 = vpack.c.b16 %v938, %v937
        %v1112 = vpack.c.b16 %v940, %v939
        %v1113 = vpack.c.b16 %v942, %v941
        %v1114 = vpack.c.b16 %v944, %v943
        %v1115 = vpack.c.b16 %v946, %v945
        %v1116 = vpack.c.b16 %v948, %v947
        %v1117 = vpack.c.b16 %v950, %v949
        %v1118 = vpack.c.b16 %v952, %v951
        %v1119 = vpack.c.b16 %v954, %v953
        %v1120 = vpack.c.b16 %v956, %v955
        %v1121 = vpack.c.b16 %v958, %v957
        %v1122 = vpack.c.b16 %v960, %v959
        %v1123 = vpack.c.b16 %v962, %v961
        %v1124 = vpack.c.b16 %v964, %v963
        %v1125 = vpack.c.b16 %v966, %v965
        %v1126 = vpack.c.b16 %v968, %v967
        %v1127 = vpack.c.b16 %v970, %v969
        %v1128 = vpack.c.b16 %v972, %v971
        %v1129 = vpack.c.b16 %v974, %v973
        %v1130 = vpack.c.b16 %v976, %v975
        %v1131 = vpack.c.b16 %v978, %v977
        %v1132 = vpack.c.b16 %v980, %v979
        %v1133 = vpack.c.b16 %v982, %v981
        %v1134 = vpack.c.b16 %v984, %v983
        %v1135 = vpack.c.b16 %v986, %v985
        %v1136 = vpack.c.b16 %v988, %v987
        %v1137 = vpack.c.b16 %v990, %v989
        %v1138 = vpack.c.b16 %v992, %v991
        %v1139 = vpack.c.b16 %v994, %v993
        %v1140 = vpack.c.b16 %v996, %v995
        %v1141 = vpack.c.b16 %v998, %v997
        %v1142 = vpack.c.b16 %v1000, %v999
        %v1143 = vpack.c.b16 %v1002, %v1001
        %v1144 = vpack.c.b16 %v1004, %v1003
        %v1145 = vpack.c.b16 %v1006, %v1005
        %v1146 = vpack.c.b16 %v1008, %v1007
        %v1147 = vpack.c.b16 %v1010, %v1009
        %v1148 = vpack.c.b16 %v1012, %v1011
        %v1149 = vpack.c.b16 %v1014, %v1013
        %v1150 = vpack.c.b16 %v1016, %v1015
        %v1151 = vpack.c.b16 %v1018, %v1017
        %v1152 = vpack.c.b16 %v1020, %v1019
        %v1153 = vpack.c.b16 %v1022, %v1021
        %v1154 = vpack.c.b16 %v1024, %v1023
        %v1155 = vpack.c.b16 %v1026, %v1025
        %v1156 = vpack.c.b16 %v1028, %v1027
        %v1161 = vunpack.c.l.b16 %v509
        %v1162 = vunpack.c.l.b16 %v510
        %v1163 = vunpack.c.l.b16 %v511
        %v1164 = vunpack.c.l.b16 %v512
        %v1165 = vpack.c.b16 %v1162, %v1161
        %v1166 = vpack.c.b16 %v1164, %v1163
        %vm1169 = vcmask 261120
        %v1171 = vsel %vm1169, %v1029, 0
        %v1174 = vsel %vm1169, %v1030, 0
        %v1177 = vsel %vm1169, %v1031, 0
        %v1180 = vsel %vm1169, %v1032, 0
        %v1183 = vsel %vm1169, %v1033, 0
        %v1186 = vsel %vm1169, %v1034, 0
        %v1189 = vsel %vm1169, %v1035, 0
        %v1192 = vsel %vm1169, %v1036, 0
        %v1195 = vsel %vm1169, %v1037, 0
        %v1198 = vsel %vm1169, %v1038, 0
        %v1201 = vsel %vm1169, %v1039, 0
        %v1204 = vsel %vm1169, %v1040, 0
        %v1207 = vsel %vm1169, %v1041, 0
        %v1210 = vsel %vm1169, %v1042, 0
        %v1213 = vsel %vm1169, %v1043, 0
        %v1216 = vsel %vm1169, %v1044, 0
        %v1219 = vsel %vm1169, %v1045, 0
        %v1222 = vsel %vm1169, %v1046, 0
        %v1225 = vsel %vm1169, %v1047, 0
        %v1228 = vsel %vm1169, %v1048, 0
        %v1231 = vsel %vm1169, %v1049, 0
        %v1234 = vsel %vm1169, %v1050, 0
        %v1237 = vsel %vm1169, %v1051, 0
        %v1240 = vsel %vm1169, %v1052, 0
        %v1243 = vsel %vm1169, %v1053, 0
        %v1246 = vsel %vm1169, %v1054, 0
        %v1249 = vsel %vm1169, %v1055, 0
        %v1252 = vsel %vm1169, %v1056, 0
        %v1255 = vsel %vm1169, %v1057, 0
        %v1258 = vsel %vm1169, %v1058, 0
        %v1261 = vsel %vm1169, %v1059, 0
        %v1264 = vsel %vm1169, %v1060, 0
        %v1267 = vsel %vm1169, %v1061, 0
        %v1270 = vsel %vm1169, %v1062, 0
        %v1273 = vsel %vm1169, %v1063, 0
        %v1276 = vsel %vm1169, %v1064, 0
        %v1279 = vsel %vm1169, %v1065, 0
        %v1282 = vsel %vm1169, %v1066, 0
        %v1285 = vsel %vm1169, %v1067, 0
        %v1288 = vsel %vm1169, %v1068, 0
        %v1291 = vsel %vm1169, %v1069, 0
        %v1294 = vsel %vm1169, %v1070, 0
        %v1297 = vsel %vm1169, %v1071, 0
        %v1300 = vsel %vm1169, %v1072, 0
        %v1303 = vsel %vm1169, %v1073, 0
        %v1306 = vsel %vm1169, %v1074, 0
        %v1309 = vsel %vm1169, %v1075, 0
        %v1312 = vsel %vm1169, %v1076, 0
        %v1315 = vsel %vm1169, %v1077, 0
        %v1318 = vsel %vm1169, %v1078, 0
        %v1321 = vsel %vm1169, %v1079, 0
        %v1324 = vsel %vm1169, %v1080, 0
        %v1327 = vsel %vm1169, %v1081, 0
        %v1330 = vsel %vm1169, %v1082, 0
        %v1333 = vsel %vm1169, %v1083, 0
        %v1336 = vsel %vm1169, %v1084, 0
        %v1339 = vsel %vm1169, %v1085, 0
        %v1342 = vsel %vm1169, %v1086, 0
        %v1345 = vsel %vm1169, %v1087, 0
        %v1348 = vsel %vm1169, %v1088, 0
        %v1351 = vsel %vm1169, %v1089, 0
        %v1354 = vsel %vm1169, %v1090, 0
        %v1357 = vsel %vm1169, %v1091, 0
        %v1360 = vsel %vm1169, %v1092, 0
        %v1363 = vsel %vm1169, %v1093, 0
        %v1366 = vsel %vm1169, %v1094, 0
        %v1369 = vsel %vm1169, %v1095, 0
        %v1372 = vsel %vm1169, %v1096, 0
        %v1375 = vsel %vm1169, %v1097, 0
        %v1378 = vsel %vm1169, %v1098, 0
        %v1381 = vsel %vm1169, %v1099, 0
        %v1384 = vsel %vm1169, %v1100, 0
        %v1387 = vsel %vm1169, %v1101, 0
        %v1390 = vsel %vm1169, %v1102, 0
        %v1393 = vsel %vm1169, %v1103, 0
        %v1396 = vsel %vm1169, %v1104, 0
        %v1399 = vsel %vm1169, %v1105, 0
        %v1402 = vsel %vm1169, %v1106, 0
        %v1405 = vsel %vm1169, %v1107, 0
        %v1408 = vsel %vm1169, %v1108, 0
        %v1411 = vsel %vm1169, %v1109, 0
        %v1414 = vsel %vm1169, %v1110, 0
        %v1417 = vsel %vm1169, %v1111, 0
        %v1420 = vsel %vm1169, %v1112, 0
        %v1423 = vsel %vm1169, %v1113, 0
        %v1426 = vsel %vm1169, %v1114, 0
        %v1429 = vsel %vm1169, %v1115, 0
        %v1432 = vsel %vm1169, %v1116, 0
        %v1435 = vsel %vm1169, %v1117, 0
        %v1438 = vsel %vm1169, %v1118, 0
        %v1441 = vsel %vm1169, %v1119, 0
        %v1444 = vsel %vm1169, %v1120, 0
        %v1447 = vsel %vm1169, %v1121, 0
        %v1450 = vsel %vm1169, %v1122, 0
        %v1453 = vsel %vm1169, %v1123, 0
        %v1456 = vsel %vm1169, %v1124, 0
        %v1459 = vsel %vm1169, %v1125, 0
        %v1462 = vsel %vm1169, %v1126, 0
        %v1465 = vsel %vm1169, %v1127, 0
        %v1468 = vsel %vm1169, %v1128, 0
        %v1471 = vsel %vm1169, %v1129, 0
        %v1474 = vsel %vm1169, %v1130, 0
        %v1477 = vsel %vm1169, %v1131, 0
        %v1480 = vsel %vm1169, %v1132, 0
        %v1483 = vsel %vm1169, %v1133, 0
        %v1486 = vsel %vm1169, %v1134, 0
        %v1489 = vsel %vm1169, %v1135, 0
        %v1492 = vsel %vm1169, %v1136, 0
        %v1495 = vsel %vm1169, %v1137, 0
        %v1498 = vsel %vm1169, %v1138, 0
        %v1501 = vsel %vm1169, %v1139, 0
        %v1504 = vsel %vm1169, %v1140, 0
        %v1507 = vsel %vm1169, %v1141, 0
        %v1510 = vsel %vm1169, %v1142, 0
        %v1513 = vsel %vm1169, %v1143, 0
        %v1516 = vsel %vm1169, %v1144, 0
        %v1519 = vsel %vm1169, %v1145, 0
        %v1522 = vsel %vm1169, %v1146, 0
        %v1525 = vsel %vm1169, %v1147, 0
        %v1528 = vsel %vm1169, %v1148, 0
        %v1531 = vsel %vm1169, %v1149, 0
        %v1534 = vsel %vm1169, %v1150, 0
        %v1537 = vsel %vm1169, %v1151, 0
        %v1540 = vsel %vm1169, %v1152, 0
        %v1543 = vsel %vm1169, %v1153, 0
        %v1546 = vsel %vm1169, %v1154, 0
        %v1549 = vsel %vm1169, %v1155, 0
        %v1552 = vsel %vm1169, %v1156, 0
        %1554 = vmatpush.bf16.msra.mxu0 0
        %1555 = vmatpush.bf16.msra.mxu0 0
        %1556 = vmatpush.bf16.msra.mxu0 0
        %1557 = vmatpush.bf16.msra.mxu0 0
        %1558 = vmatpush.bf16.msra.mxu0 0
        %1559 = vmatpush.bf16.msra.mxu0 0
        %1560 = vmatpush.bf16.msra.mxu0 %v1166
        %1561 = vmatpush.bf16.msra.mxu0 %v1165
        %1562 = vmatmul.bf16.gmra.mxu0 %v1171
        %v1563 = vpop.f32.mrf.mxu0
        %v1564 = vadd.f32 %v515, %v1563
        %v1565 = vpop.f32.mrf.mxu0
        %v1566 = vadd.f32 %v515, %v1565
        %1567 = vmatmul.bf16.gmra.mxu0 %v1174
        %v1568 = vpop.f32.mrf.mxu0
        %v1569 = vadd.f32 %v515, %v1568
        %v1570 = vpop.f32.mrf.mxu0
        %v1571 = vadd.f32 %v515, %v1570
        %1572 = vmatmul.bf16.gmra.mxu0 %v1177
        %v1573 = vpop.f32.mrf.mxu0
        %v1574 = vadd.f32 %v515, %v1573
        %v1575 = vpop.f32.mrf.mxu0
        %v1576 = vadd.f32 %v515, %v1575
        %1577 = vmatmul.bf16.gmra.mxu0 %v1180
        %v1578 = vpop.f32.mrf.mxu0
        %v1579 = vadd.f32 %v515, %v1578
        %v1580 = vpop.f32.mrf.mxu0
        %v1581 = vadd.f32 %v515, %v1580
        %1582 = vmatmul.bf16.gmra.mxu0 %v1183
        %v1583 = vpop.f32.mrf.mxu0
        %v1584 = vadd.f32 %v515, %v1583
        %v1585 = vpop.f32.mrf.mxu0
        %v1586 = vadd.f32 %v515, %v1585
        %1587 = vmatmul.bf16.gmra.mxu0 %v1186
        %v1588 = vpop.f32.mrf.mxu0
        %v1589 = vadd.f32 %v515, %v1588
        %v1590 = vpop.f32.mrf.mxu0
        %v1591 = vadd.f32 %v515, %v1590
        %1592 = vmatmul.bf16.gmra.mxu0 %v1189
        %v1593 = vpop.f32.mrf.mxu0
        %v1594 = vadd.f32 %v515, %v1593
        %v1595 = vpop.f32.mrf.mxu0
        %v1596 = vadd.f32 %v515, %v1595
        %1597 = vmatmul.bf16.gmra.mxu0 %v1192
        %v1598 = vpop.f32.mrf.mxu0
        %v1599 = vadd.f32 %v515, %v1598
        %v1600 = vpop.f32.mrf.mxu0
        %v1601 = vadd.f32 %v515, %v1600
        %1602 = vmatmul.bf16.gmra.mxu0 %v1195
        %v1603 = vpop.f32.mrf.mxu0
        %v1604 = vadd.f32 %v515, %v1603
        %v1605 = vpop.f32.mrf.mxu0
        %v1606 = vadd.f32 %v515, %v1605
        %1607 = vmatmul.bf16.gmra.mxu0 %v1198
        %v1608 = vpop.f32.mrf.mxu0
        %v1609 = vadd.f32 %v515, %v1608
        %v1610 = vpop.f32.mrf.mxu0
        %v1611 = vadd.f32 %v515, %v1610
        %1612 = vmatmul.bf16.gmra.mxu0 %v1201
        %v1613 = vpop.f32.mrf.mxu0
        %v1614 = vadd.f32 %v515, %v1613
        %v1615 = vpop.f32.mrf.mxu0
        %v1616 = vadd.f32 %v515, %v1615
        %1617 = vmatmul.bf16.gmra.mxu0 %v1204
        %v1618 = vpop.f32.mrf.mxu0
        %v1619 = vadd.f32 %v515, %v1618
        %v1620 = vpop.f32.mrf.mxu0
        %v1621 = vadd.f32 %v515, %v1620
        %1622 = vmatmul.bf16.gmra.mxu0 %v1207
        %v1623 = vpop.f32.mrf.mxu0
        %v1624 = vadd.f32 %v515, %v1623
        %v1625 = vpop.f32.mrf.mxu0
        %v1626 = vadd.f32 %v515, %v1625
        %1627 = vmatmul.bf16.gmra.mxu0 %v1210
        %v1628 = vpop.f32.mrf.mxu0
        %v1629 = vadd.f32 %v515, %v1628
        %v1630 = vpop.f32.mrf.mxu0
        %v1631 = vadd.f32 %v515, %v1630
        %1632 = vmatmul.bf16.gmra.mxu0 %v1213
        %v1633 = vpop.f32.mrf.mxu0
        %v1634 = vadd.f32 %v515, %v1633
        %v1635 = vpop.f32.mrf.mxu0
        %v1636 = vadd.f32 %v515, %v1635
        %1637 = vmatmul.bf16.gmra.mxu0 %v1216
        %v1638 = vpop.f32.mrf.mxu0
        %v1639 = vadd.f32 %v515, %v1638
        %v1640 = vpop.f32.mrf.mxu0
        %v1641 = vadd.f32 %v515, %v1640
        %1642 = vmatmul.bf16.gmra.mxu0 %v1219
        %v1643 = vpop.f32.mrf.mxu0
        %v1644 = vadd.f32 %v515, %v1643
        %v1645 = vpop.f32.mrf.mxu0
        %v1646 = vadd.f32 %v515, %v1645
        %1647 = vmatmul.bf16.gmra.mxu0 %v1222
        %v1648 = vpop.f32.mrf.mxu0
        %v1649 = vadd.f32 %v515, %v1648
        %v1650 = vpop.f32.mrf.mxu0
        %v1651 = vadd.f32 %v515, %v1650
        %1652 = vmatmul.bf16.gmra.mxu0 %v1225
        %v1653 = vpop.f32.mrf.mxu0
        %v1654 = vadd.f32 %v515, %v1653
        %v1655 = vpop.f32.mrf.mxu0
        %v1656 = vadd.f32 %v515, %v1655
        %1657 = vmatmul.bf16.gmra.mxu0 %v1228
        %v1658 = vpop.f32.mrf.mxu0
        %v1659 = vadd.f32 %v515, %v1658
        %v1660 = vpop.f32.mrf.mxu0
        %v1661 = vadd.f32 %v515, %v1660
        %1662 = vmatmul.bf16.gmra.mxu0 %v1231
        %v1663 = vpop.f32.mrf.mxu0
        %v1664 = vadd.f32 %v515, %v1663
        %v1665 = vpop.f32.mrf.mxu0
        %v1666 = vadd.f32 %v515, %v1665
        %1667 = vmatmul.bf16.gmra.mxu0 %v1234
        %v1668 = vpop.f32.mrf.mxu0
        %v1669 = vadd.f32 %v515, %v1668
        %v1670 = vpop.f32.mrf.mxu0
        %v1671 = vadd.f32 %v515, %v1670
        %1672 = vmatmul.bf16.gmra.mxu0 %v1237
        %v1673 = vpop.f32.mrf.mxu0
        %v1674 = vadd.f32 %v515, %v1673
        %v1675 = vpop.f32.mrf.mxu0
        %v1676 = vadd.f32 %v515, %v1675
        %1677 = vmatmul.bf16.gmra.mxu0 %v1240
        %v1678 = vpop.f32.mrf.mxu0
        %v1679 = vadd.f32 %v515, %v1678
        %v1680 = vpop.f32.mrf.mxu0
        %v1681 = vadd.f32 %v515, %v1680
        %1682 = vmatmul.bf16.gmra.mxu0 %v1243
        %v1683 = vpop.f32.mrf.mxu0
        %v1684 = vadd.f32 %v515, %v1683
        %v1685 = vpop.f32.mrf.mxu0
        %v1686 = vadd.f32 %v515, %v1685
        %1687 = vmatmul.bf16.gmra.mxu0 %v1246
        %v1688 = vpop.f32.mrf.mxu0
        %v1689 = vadd.f32 %v515, %v1688
        %v1690 = vpop.f32.mrf.mxu0
        %v1691 = vadd.f32 %v515, %v1690
        %1692 = vmatmul.bf16.gmra.mxu0 %v1249
        %v1693 = vpop.f32.mrf.mxu0
        %v1694 = vadd.f32 %v515, %v1693
        %v1695 = vpop.f32.mrf.mxu0
        %v1696 = vadd.f32 %v515, %v1695
        %1697 = vmatmul.bf16.gmra.mxu0 %v1252
        %v1698 = vpop.f32.mrf.mxu0
        %v1699 = vadd.f32 %v515, %v1698
        %v1700 = vpop.f32.mrf.mxu0
        %v1701 = vadd.f32 %v515, %v1700
        %1702 = vmatmul.bf16.gmra.mxu0 %v1255
        %v1703 = vpop.f32.mrf.mxu0
        %v1704 = vadd.f32 %v515, %v1703
        %v1705 = vpop.f32.mrf.mxu0
        %v1706 = vadd.f32 %v515, %v1705
        %1707 = vmatmul.bf16.gmra.mxu0 %v1258
        %v1708 = vpop.f32.mrf.mxu0
        %v1709 = vadd.f32 %v515, %v1708
        %v1710 = vpop.f32.mrf.mxu0
        %v1711 = vadd.f32 %v515, %v1710
        %1712 = vmatmul.bf16.gmra.mxu0 %v1261
        %v1713 = vpop.f32.mrf.mxu0
        %v1714 = vadd.f32 %v515, %v1713
        %v1715 = vpop.f32.mrf.mxu0
        %v1716 = vadd.f32 %v515, %v1715
        %1717 = vmatmul.bf16.gmra.mxu0 %v1264
        %v1718 = vpop.f32.mrf.mxu0
        %v1719 = vadd.f32 %v515, %v1718
        %v1720 = vpop.f32.mrf.mxu0
        %v1721 = vadd.f32 %v515, %v1720
        %1722 = vmatmul.bf16.gmra.mxu0 %v1267
        %v1723 = vpop.f32.mrf.mxu0
        %v1724 = vadd.f32 %v515, %v1723
        %v1725 = vpop.f32.mrf.mxu0
        %v1726 = vadd.f32 %v515, %v1725
        %1727 = vmatmul.bf16.gmra.mxu0 %v1270
        %v1728 = vpop.f32.mrf.mxu0
        %v1729 = vadd.f32 %v515, %v1728
        %v1730 = vpop.f32.mrf.mxu0
        %v1731 = vadd.f32 %v515, %v1730
        %1732 = vmatmul.bf16.gmra.mxu0 %v1273
        %v1733 = vpop.f32.mrf.mxu0
        %v1734 = vadd.f32 %v515, %v1733
        %v1735 = vpop.f32.mrf.mxu0
        %v1736 = vadd.f32 %v515, %v1735
        %1737 = vmatmul.bf16.gmra.mxu0 %v1276
        %v1738 = vpop.f32.mrf.mxu0
        %v1739 = vadd.f32 %v515, %v1738
        %v1740 = vpop.f32.mrf.mxu0
        %v1741 = vadd.f32 %v515, %v1740
        %1742 = vmatmul.bf16.gmra.mxu0 %v1279
        %v1743 = vpop.f32.mrf.mxu0
        %v1744 = vadd.f32 %v515, %v1743
        %v1745 = vpop.f32.mrf.mxu0
        %v1746 = vadd.f32 %v515, %v1745
        %1747 = vmatmul.bf16.gmra.mxu0 %v1282
        %v1748 = vpop.f32.mrf.mxu0
        %v1749 = vadd.f32 %v515, %v1748
        %v1750 = vpop.f32.mrf.mxu0
        %v1751 = vadd.f32 %v515, %v1750
        %1752 = vmatmul.bf16.gmra.mxu0 %v1285
        %v1753 = vpop.f32.mrf.mxu0
        %v1754 = vadd.f32 %v515, %v1753
        %v1755 = vpop.f32.mrf.mxu0
        %v1756 = vadd.f32 %v515, %v1755
        %1757 = vmatmul.bf16.gmra.mxu0 %v1288
        %v1758 = vpop.f32.mrf.mxu0
        %v1759 = vadd.f32 %v515, %v1758
        %v1760 = vpop.f32.mrf.mxu0
        %v1761 = vadd.f32 %v515, %v1760
        %1762 = vmatmul.bf16.gmra.mxu0 %v1291
        %v1763 = vpop.f32.mrf.mxu0
        %v1764 = vadd.f32 %v515, %v1763
        %v1765 = vpop.f32.mrf.mxu0
        %v1766 = vadd.f32 %v515, %v1765
        %1767 = vmatmul.bf16.gmra.mxu0 %v1294
        %v1768 = vpop.f32.mrf.mxu0
        %v1769 = vadd.f32 %v515, %v1768
        %v1770 = vpop.f32.mrf.mxu0
        %v1771 = vadd.f32 %v515, %v1770
        %1772 = vmatmul.bf16.gmra.mxu0 %v1297
        %v1773 = vpop.f32.mrf.mxu0
        %v1774 = vadd.f32 %v515, %v1773
        %v1775 = vpop.f32.mrf.mxu0
        %v1776 = vadd.f32 %v515, %v1775
        %1777 = vmatmul.bf16.gmra.mxu0 %v1300
        %v1778 = vpop.f32.mrf.mxu0
        %v1779 = vadd.f32 %v515, %v1778
        %v1780 = vpop.f32.mrf.mxu0
        %v1781 = vadd.f32 %v515, %v1780
        %1782 = vmatmul.bf16.gmra.mxu0 %v1303
        %v1783 = vpop.f32.mrf.mxu0
        %v1784 = vadd.f32 %v515, %v1783
        %v1785 = vpop.f32.mrf.mxu0
        %v1786 = vadd.f32 %v515, %v1785
        %1787 = vmatmul.bf16.gmra.mxu0 %v1306
        %v1788 = vpop.f32.mrf.mxu0
        %v1789 = vadd.f32 %v515, %v1788
        %v1790 = vpop.f32.mrf.mxu0
        %v1791 = vadd.f32 %v515, %v1790
        %1792 = vmatmul.bf16.gmra.mxu0 %v1309
        %v1793 = vpop.f32.mrf.mxu0
        %v1794 = vadd.f32 %v515, %v1793
        %v1795 = vpop.f32.mrf.mxu0
        %v1796 = vadd.f32 %v515, %v1795
        %1797 = vmatmul.bf16.gmra.mxu0 %v1312
        %v1798 = vpop.f32.mrf.mxu0
        %v1799 = vadd.f32 %v515, %v1798
        %v1800 = vpop.f32.mrf.mxu0
        %v1801 = vadd.f32 %v515, %v1800
        %1802 = vmatmul.bf16.gmra.mxu0 %v1315
        %v1803 = vpop.f32.mrf.mxu0
        %v1804 = vadd.f32 %v515, %v1803
        %v1805 = vpop.f32.mrf.mxu0
        %v1806 = vadd.f32 %v515, %v1805
        %1807 = vmatmul.bf16.gmra.mxu0 %v1318
        %v1808 = vpop.f32.mrf.mxu0
        %v1809 = vadd.f32 %v515, %v1808
        %v1810 = vpop.f32.mrf.mxu0
        %v1811 = vadd.f32 %v515, %v1810
        %1812 = vmatmul.bf16.gmra.mxu0 %v1321
        %v1813 = vpop.f32.mrf.mxu0
        %v1814 = vadd.f32 %v515, %v1813
        %v1815 = vpop.f32.mrf.mxu0
        %v1816 = vadd.f32 %v515, %v1815
        %1817 = vmatmul.bf16.gmra.mxu0 %v1324
        %v1818 = vpop.f32.mrf.mxu0
        %v1819 = vadd.f32 %v515, %v1818
        %v1820 = vpop.f32.mrf.mxu0
        %v1821 = vadd.f32 %v515, %v1820
        %1822 = vmatmul.bf16.gmra.mxu0 %v1327
        %v1823 = vpop.f32.mrf.mxu0
        %v1824 = vadd.f32 %v515, %v1823
        %v1825 = vpop.f32.mrf.mxu0
        %v1826 = vadd.f32 %v515, %v1825
        %1827 = vmatmul.bf16.gmra.mxu0 %v1330
        %v1828 = vpop.f32.mrf.mxu0
        %v1829 = vadd.f32 %v515, %v1828
        %v1830 = vpop.f32.mrf.mxu0
        %v1831 = vadd.f32 %v515, %v1830
        %1832 = vmatmul.bf16.gmra.mxu0 %v1333
        %v1833 = vpop.f32.mrf.mxu0
        %v1834 = vadd.f32 %v515, %v1833
        %v1835 = vpop.f32.mrf.mxu0
        %v1836 = vadd.f32 %v515, %v1835
        %1837 = vmatmul.bf16.gmra.mxu0 %v1336
        %v1838 = vpop.f32.mrf.mxu0
        %v1839 = vadd.f32 %v515, %v1838
        %v1840 = vpop.f32.mrf.mxu0
        %v1841 = vadd.f32 %v515, %v1840
        %1842 = vmatmul.bf16.gmra.mxu0 %v1339
        %v1843 = vpop.f32.mrf.mxu0
        %v1844 = vadd.f32 %v515, %v1843
        %v1845 = vpop.f32.mrf.mxu0
        %v1846 = vadd.f32 %v515, %v1845
        %1847 = vmatmul.bf16.gmra.mxu0 %v1342
        %v1848 = vpop.f32.mrf.mxu0
        %v1849 = vadd.f32 %v515, %v1848
        %v1850 = vpop.f32.mrf.mxu0
        %v1851 = vadd.f32 %v515, %v1850
        %1852 = vmatmul.bf16.gmra.mxu0 %v1345
        %v1853 = vpop.f32.mrf.mxu0
        %v1854 = vadd.f32 %v515, %v1853
        %v1855 = vpop.f32.mrf.mxu0
        %v1856 = vadd.f32 %v515, %v1855
        %1857 = vmatmul.bf16.gmra.mxu0 %v1348
        %v1858 = vpop.f32.mrf.mxu0
        %v1859 = vadd.f32 %v515, %v1858
        %v1860 = vpop.f32.mrf.mxu0
        %v1861 = vadd.f32 %v515, %v1860
        %1862 = vmatmul.bf16.gmra.mxu0 %v1351
        %v1863 = vpop.f32.mrf.mxu0
        %v1864 = vadd.f32 %v515, %v1863
        %v1865 = vpop.f32.mrf.mxu0
        %v1866 = vadd.f32 %v515, %v1865
        %1867 = vmatmul.bf16.gmra.mxu0 %v1354
        %v1868 = vpop.f32.mrf.mxu0
        %v1869 = vadd.f32 %v515, %v1868
        %v1870 = vpop.f32.mrf.mxu0
        %v1871 = vadd.f32 %v515, %v1870
        %1872 = vmatmul.bf16.gmra.mxu0 %v1357
        %v1873 = vpop.f32.mrf.mxu0
        %v1874 = vadd.f32 %v515, %v1873
        %v1875 = vpop.f32.mrf.mxu0
        %v1876 = vadd.f32 %v515, %v1875
        %1877 = vmatmul.bf16.gmra.mxu0 %v1360
        %v1878 = vpop.f32.mrf.mxu0
        %v1879 = vadd.f32 %v515, %v1878
        %v1880 = vpop.f32.mrf.mxu0
        %v1881 = vadd.f32 %v515, %v1880
        %1882 = vmatmul.bf16.gmra.mxu0 %v1363
        %v1883 = vpop.f32.mrf.mxu0
        %v1884 = vadd.f32 %v515, %v1883
        %v1885 = vpop.f32.mrf.mxu0
        %v1886 = vadd.f32 %v515, %v1885
        %1887 = vmatmul.bf16.gmra.mxu0 %v1366
        %v1888 = vpop.f32.mrf.mxu0
        %v1889 = vadd.f32 %v515, %v1888
        %v1890 = vpop.f32.mrf.mxu0
        %v1891 = vadd.f32 %v515, %v1890
        %1892 = vmatmul.bf16.gmra.mxu0 %v1369
        %v1893 = vpop.f32.mrf.mxu0
        %v1894 = vadd.f32 %v515, %v1893
        %v1895 = vpop.f32.mrf.mxu0
        %v1896 = vadd.f32 %v515, %v1895
        %1897 = vmatmul.bf16.gmra.mxu0 %v1372
        %v1898 = vpop.f32.mrf.mxu0
        %v1899 = vadd.f32 %v515, %v1898
        %v1900 = vpop.f32.mrf.mxu0
        %v1901 = vadd.f32 %v515, %v1900
        %1902 = vmatmul.bf16.gmra.mxu0 %v1375
        %v1903 = vpop.f32.mrf.mxu0
        %v1904 = vadd.f32 %v515, %v1903
        %v1905 = vpop.f32.mrf.mxu0
        %v1906 = vadd.f32 %v515, %v1905
        %1907 = vmatmul.bf16.gmra.mxu0 %v1378
        %v1908 = vpop.f32.mrf.mxu0
        %v1909 = vadd.f32 %v515, %v1908
        %v1910 = vpop.f32.mrf.mxu0
        %v1911 = vadd.f32 %v515, %v1910
        %1912 = vmatmul.bf16.gmra.mxu0 %v1381
        %v1913 = vpop.f32.mrf.mxu0
        %v1914 = vadd.f32 %v515, %v1913
        %v1915 = vpop.f32.mrf.mxu0
        %v1916 = vadd.f32 %v515, %v1915
        %1917 = vmatmul.bf16.gmra.mxu0 %v1384
        %v1918 = vpop.f32.mrf.mxu0
        %v1919 = vadd.f32 %v515, %v1918
        %v1920 = vpop.f32.mrf.mxu0
        %v1921 = vadd.f32 %v515, %v1920
        %1922 = vmatmul.bf16.gmra.mxu0 %v1387
        %v1923 = vpop.f32.mrf.mxu0
        %v1924 = vadd.f32 %v515, %v1923
        %v1925 = vpop.f32.mrf.mxu0
        %v1926 = vadd.f32 %v515, %v1925
        %1927 = vmatmul.bf16.gmra.mxu0 %v1390
        %v1928 = vpop.f32.mrf.mxu0
        %v1929 = vadd.f32 %v515, %v1928
        %v1930 = vpop.f32.mrf.mxu0
        %v1931 = vadd.f32 %v515, %v1930
        %1932 = vmatmul.bf16.gmra.mxu0 %v1393
        %v1933 = vpop.f32.mrf.mxu0
        %v1934 = vadd.f32 %v515, %v1933
        %v1935 = vpop.f32.mrf.mxu0
        %v1936 = vadd.f32 %v515, %v1935
        %1937 = vmatmul.bf16.gmra.mxu0 %v1396
        %v1938 = vpop.f32.mrf.mxu0
        %v1939 = vadd.f32 %v515, %v1938
        %v1940 = vpop.f32.mrf.mxu0
        %v1941 = vadd.f32 %v515, %v1940
        %1942 = vmatmul.bf16.gmra.mxu0 %v1399
        %v1943 = vpop.f32.mrf.mxu0
        %v1944 = vadd.f32 %v515, %v1943
        %v1945 = vpop.f32.mrf.mxu0
        %v1946 = vadd.f32 %v515, %v1945
        %1947 = vmatmul.bf16.gmra.mxu0 %v1402
        %v1948 = vpop.f32.mrf.mxu0
        %v1949 = vadd.f32 %v515, %v1948
        %v1950 = vpop.f32.mrf.mxu0
        %v1951 = vadd.f32 %v515, %v1950
        %1952 = vmatmul.bf16.gmra.mxu0 %v1405
        %v1953 = vpop.f32.mrf.mxu0
        %v1954 = vadd.f32 %v515, %v1953
        %v1955 = vpop.f32.mrf.mxu0
        %v1956 = vadd.f32 %v515, %v1955
        %1957 = vmatmul.bf16.gmra.mxu0 %v1408
        %v1958 = vpop.f32.mrf.mxu0
        %v1959 = vadd.f32 %v515, %v1958
        %v1960 = vpop.f32.mrf.mxu0
        %v1961 = vadd.f32 %v515, %v1960
        %1962 = vmatmul.bf16.gmra.mxu0 %v1411
        %v1963 = vpop.f32.mrf.mxu0
        %v1964 = vadd.f32 %v515, %v1963
        %v1965 = vpop.f32.mrf.mxu0
        %v1966 = vadd.f32 %v515, %v1965
        %1967 = vmatmul.bf16.gmra.mxu0 %v1414
        %v1968 = vpop.f32.mrf.mxu0
        %v1969 = vadd.f32 %v515, %v1968
        %v1970 = vpop.f32.mrf.mxu0
        %v1971 = vadd.f32 %v515, %v1970
        %1972 = vmatmul.bf16.gmra.mxu0 %v1417
        %v1973 = vpop.f32.mrf.mxu0
        %v1974 = vadd.f32 %v515, %v1973
        %v1975 = vpop.f32.mrf.mxu0
        %v1976 = vadd.f32 %v515, %v1975
        %1977 = vmatmul.bf16.gmra.mxu0 %v1420
        %v1978 = vpop.f32.mrf.mxu0
        %v1979 = vadd.f32 %v515, %v1978
        %v1980 = vpop.f32.mrf.mxu0
        %v1981 = vadd.f32 %v515, %v1980
        %1982 = vmatmul.bf16.gmra.mxu0 %v1423
        %v1983 = vpop.f32.mrf.mxu0
        %v1984 = vadd.f32 %v515, %v1983
        %v1985 = vpop.f32.mrf.mxu0
        %v1986 = vadd.f32 %v515, %v1985
        %1987 = vmatmul.bf16.gmra.mxu0 %v1426
        %v1988 = vpop.f32.mrf.mxu0
        %v1989 = vadd.f32 %v515, %v1988
        %v1990 = vpop.f32.mrf.mxu0
        %v1991 = vadd.f32 %v515, %v1990
        %1992 = vmatmul.bf16.gmra.mxu0 %v1429
        %v1993 = vpop.f32.mrf.mxu0
        %v1994 = vadd.f32 %v515, %v1993
        %v1995 = vpop.f32.mrf.mxu0
        %v1996 = vadd.f32 %v515, %v1995
        %1997 = vmatmul.bf16.gmra.mxu0 %v1432
        %v1998 = vpop.f32.mrf.mxu0
        %v1999 = vadd.f32 %v515, %v1998
        %v2000 = vpop.f32.mrf.mxu0
        %v2001 = vadd.f32 %v515, %v2000
        %2002 = vmatmul.bf16.gmra.mxu0 %v1435
        %v2003 = vpop.f32.mrf.mxu0
        %v2004 = vadd.f32 %v515, %v2003
        %v2005 = vpop.f32.mrf.mxu0
        %v2006 = vadd.f32 %v515, %v2005
        %2007 = vmatmul.bf16.gmra.mxu0 %v1438
        %v2008 = vpop.f32.mrf.mxu0
        %v2009 = vadd.f32 %v515, %v2008
        %v2010 = vpop.f32.mrf.mxu0
        %v2011 = vadd.f32 %v515, %v2010
        %2012 = vmatmul.bf16.gmra.mxu0 %v1441
        %v2013 = vpop.f32.mrf.mxu0
        %v2014 = vadd.f32 %v515, %v2013
        %v2015 = vpop.f32.mrf.mxu0
        %v2016 = vadd.f32 %v515, %v2015
        %2017 = vmatmul.bf16.gmra.mxu0 %v1444
        %v2018 = vpop.f32.mrf.mxu0
        %v2019 = vadd.f32 %v515, %v2018
        %v2020 = vpop.f32.mrf.mxu0
        %v2021 = vadd.f32 %v515, %v2020
        %2022 = vmatmul.bf16.gmra.mxu0 %v1447
        %v2023 = vpop.f32.mrf.mxu0
        %v2024 = vadd.f32 %v515, %v2023
        %v2025 = vpop.f32.mrf.mxu0
        %v2026 = vadd.f32 %v515, %v2025
        %2027 = vmatmul.bf16.gmra.mxu0 %v1450
        %v2028 = vpop.f32.mrf.mxu0
        %v2029 = vadd.f32 %v515, %v2028
        %v2030 = vpop.f32.mrf.mxu0
        %v2031 = vadd.f32 %v515, %v2030
        %2032 = vmatmul.bf16.gmra.mxu0 %v1453
        %v2033 = vpop.f32.mrf.mxu0
        %v2034 = vadd.f32 %v515, %v2033
        %v2035 = vpop.f32.mrf.mxu0
        %v2036 = vadd.f32 %v515, %v2035
        %2037 = vmatmul.bf16.gmra.mxu0 %v1456
        %v2038 = vpop.f32.mrf.mxu0
        %v2039 = vadd.f32 %v515, %v2038
        %v2040 = vpop.f32.mrf.mxu0
        %v2041 = vadd.f32 %v515, %v2040
        %2042 = vmatmul.bf16.gmra.mxu0 %v1459
        %v2043 = vpop.f32.mrf.mxu0
        %v2044 = vadd.f32 %v515, %v2043
        %v2045 = vpop.f32.mrf.mxu0
        %v2046 = vadd.f32 %v515, %v2045
        %2047 = vmatmul.bf16.gmra.mxu0 %v1462
        %v2048 = vpop.f32.mrf.mxu0
        %v2049 = vadd.f32 %v515, %v2048
        %v2050 = vpop.f32.mrf.mxu0
        %v2051 = vadd.f32 %v515, %v2050
        %2052 = vmatmul.bf16.gmra.mxu0 %v1465
        %v2053 = vpop.f32.mrf.mxu0
        %v2054 = vadd.f32 %v515, %v2053
        %v2055 = vpop.f32.mrf.mxu0
        %v2056 = vadd.f32 %v515, %v2055
        %2057 = vmatmul.bf16.gmra.mxu0 %v1468
        %v2058 = vpop.f32.mrf.mxu0
        %v2059 = vadd.f32 %v515, %v2058
        %v2060 = vpop.f32.mrf.mxu0
        %v2061 = vadd.f32 %v515, %v2060
        %2062 = vmatmul.bf16.gmra.mxu0 %v1471
        %v2063 = vpop.f32.mrf.mxu0
        %v2064 = vadd.f32 %v515, %v2063
        %v2065 = vpop.f32.mrf.mxu0
        %v2066 = vadd.f32 %v515, %v2065
        %2067 = vmatmul.bf16.gmra.mxu0 %v1474
        %v2068 = vpop.f32.mrf.mxu0
        %v2069 = vadd.f32 %v515, %v2068
        %v2070 = vpop.f32.mrf.mxu0
        %v2071 = vadd.f32 %v515, %v2070
        %2072 = vmatmul.bf16.gmra.mxu0 %v1477
        %v2073 = vpop.f32.mrf.mxu0
        %v2074 = vadd.f32 %v515, %v2073
        %v2075 = vpop.f32.mrf.mxu0
        %v2076 = vadd.f32 %v515, %v2075
        %2077 = vmatmul.bf16.gmra.mxu0 %v1480
        %v2078 = vpop.f32.mrf.mxu0
        %v2079 = vadd.f32 %v515, %v2078
        %v2080 = vpop.f32.mrf.mxu0
        %v2081 = vadd.f32 %v515, %v2080
        %2082 = vmatmul.bf16.gmra.mxu0 %v1483
        %v2083 = vpop.f32.mrf.mxu0
        %v2084 = vadd.f32 %v515, %v2083
        %v2085 = vpop.f32.mrf.mxu0
        %v2086 = vadd.f32 %v515, %v2085
        %2087 = vmatmul.bf16.gmra.mxu0 %v1486
        %v2088 = vpop.f32.mrf.mxu0
        %v2089 = vadd.f32 %v515, %v2088
        %v2090 = vpop.f32.mrf.mxu0
        %v2091 = vadd.f32 %v515, %v2090
        %2092 = vmatmul.bf16.gmra.mxu0 %v1489
        %v2093 = vpop.f32.mrf.mxu0
        %v2094 = vadd.f32 %v515, %v2093
        %v2095 = vpop.f32.mrf.mxu0
        %v2096 = vadd.f32 %v515, %v2095
        %2097 = vmatmul.bf16.gmra.mxu0 %v1492
        %v2098 = vpop.f32.mrf.mxu0
        %v2099 = vadd.f32 %v515, %v2098
        %v2100 = vpop.f32.mrf.mxu0
        %v2101 = vadd.f32 %v515, %v2100
        %2102 = vmatmul.bf16.gmra.mxu0 %v1495
        %v2103 = vpop.f32.mrf.mxu0
        %v2104 = vadd.f32 %v515, %v2103
        %v2105 = vpop.f32.mrf.mxu0
        %v2106 = vadd.f32 %v515, %v2105
        %2107 = vmatmul.bf16.gmra.mxu0 %v1498
        %v2108 = vpop.f32.mrf.mxu0
        %v2109 = vadd.f32 %v515, %v2108
        %v2110 = vpop.f32.mrf.mxu0
        %v2111 = vadd.f32 %v515, %v2110
        %2112 = vmatmul.bf16.gmra.mxu0 %v1501
        %v2113 = vpop.f32.mrf.mxu0
        %v2114 = vadd.f32 %v515, %v2113
        %v2115 = vpop.f32.mrf.mxu0
        %v2116 = vadd.f32 %v515, %v2115
        %2117 = vmatmul.bf16.gmra.mxu0 %v1504
        %v2118 = vpop.f32.mrf.mxu0
        %v2119 = vadd.f32 %v515, %v2118
        %v2120 = vpop.f32.mrf.mxu0
        %v2121 = vadd.f32 %v515, %v2120
        %2122 = vmatmul.bf16.gmra.mxu0 %v1507
        %v2123 = vpop.f32.mrf.mxu0
        %v2124 = vadd.f32 %v515, %v2123
        %v2125 = vpop.f32.mrf.mxu0
        %v2126 = vadd.f32 %v515, %v2125
        %2127 = vmatmul.bf16.gmra.mxu0 %v1510
        %v2128 = vpop.f32.mrf.mxu0
        %v2129 = vadd.f32 %v515, %v2128
        %v2130 = vpop.f32.mrf.mxu0
        %v2131 = vadd.f32 %v515, %v2130
        %2132 = vmatmul.bf16.gmra.mxu0 %v1513
        %v2133 = vpop.f32.mrf.mxu0
        %v2134 = vadd.f32 %v515, %v2133
        %v2135 = vpop.f32.mrf.mxu0
        %v2136 = vadd.f32 %v515, %v2135
        %2137 = vmatmul.bf16.gmra.mxu0 %v1516
        %v2138 = vpop.f32.mrf.mxu0
        %v2139 = vadd.f32 %v515, %v2138
        %v2140 = vpop.f32.mrf.mxu0
        %v2141 = vadd.f32 %v515, %v2140
        %2142 = vmatmul.bf16.gmra.mxu0 %v1519
        %v2143 = vpop.f32.mrf.mxu0
        %v2144 = vadd.f32 %v515, %v2143
        %v2145 = vpop.f32.mrf.mxu0
        %v2146 = vadd.f32 %v515, %v2145
        %2147 = vmatmul.bf16.gmra.mxu0 %v1522
        %v2148 = vpop.f32.mrf.mxu0
        %v2149 = vadd.f32 %v515, %v2148
        %v2150 = vpop.f32.mrf.mxu0
        %v2151 = vadd.f32 %v515, %v2150
        %2152 = vmatmul.bf16.gmra.mxu0 %v1525
        %v2153 = vpop.f32.mrf.mxu0
        %v2154 = vadd.f32 %v515, %v2153
        %v2155 = vpop.f32.mrf.mxu0
        %v2156 = vadd.f32 %v515, %v2155
        %2157 = vmatmul.bf16.gmra.mxu0 %v1528
        %v2158 = vpop.f32.mrf.mxu0
        %v2159 = vadd.f32 %v515, %v2158
        %v2160 = vpop.f32.mrf.mxu0
        %v2161 = vadd.f32 %v515, %v2160
        %2162 = vmatmul.bf16.gmra.mxu0 %v1531
        %v2163 = vpop.f32.mrf.mxu0
        %v2164 = vadd.f32 %v515, %v2163
        %v2165 = vpop.f32.mrf.mxu0
        %v2166 = vadd.f32 %v515, %v2165
        %2167 = vmatmul.bf16.gmra.mxu0 %v1534
        %v2168 = vpop.f32.mrf.mxu0
        %v2169 = vadd.f32 %v515, %v2168
        %v2170 = vpop.f32.mrf.mxu0
        %v2171 = vadd.f32 %v515, %v2170
        %2172 = vmatmul.bf16.gmra.mxu0 %v1537
        %v2173 = vpop.f32.mrf.mxu0
        %v2174 = vadd.f32 %v515, %v2173
        %v2175 = vpop.f32.mrf.mxu0
        %v2176 = vadd.f32 %v515, %v2175
        %2177 = vmatmul.bf16.gmra.mxu0 %v1540
        %v2178 = vpop.f32.mrf.mxu0
        %v2179 = vadd.f32 %v515, %v2178
        %v2180 = vpop.f32.mrf.mxu0
        %v2181 = vadd.f32 %v515, %v2180
        %2182 = vmatmul.bf16.gmra.mxu0 %v1543
        %v2183 = vpop.f32.mrf.mxu0
        %v2184 = vadd.f32 %v515, %v2183
        %v2185 = vpop.f32.mrf.mxu0
        %v2186 = vadd.f32 %v515, %v2185
        %2187 = vmatmul.bf16.gmra.mxu0 %v1546
        %v2188 = vpop.f32.mrf.mxu0
        %v2189 = vadd.f32 %v515, %v2188
        %v2190 = vpop.f32.mrf.mxu0
        %v2191 = vadd.f32 %v515, %v2190
        %2192 = vmatmul.bf16.gmra.mxu0 %v1549
        %v2193 = vpop.f32.mrf.mxu0
        %v2194 = vadd.f32 %v515, %v2193
        %v2195 = vpop.f32.mrf.mxu0
        %v2196 = vadd.f32 %v515, %v2195
        %2197 = vmatmul.bf16.gmra.mxu0 %v1552
        %v2198 = vpop.f32.mrf.mxu0
        %v2199 = vadd.f32 %v515, %v2198
        %v2200 = vpop.f32.mrf.mxu0
        %v2201 = vadd.f32 %v515, %v2200
        %2202 = vdwg.mxu0
        %v2203 = vmax.f32 %v1564, 0.0
        %v2204 = vmax.f32 %v1566, 0.0
        %v2205 = vmax.f32 %v1569, 0.0
        %v2206 = vmax.f32 %v1571, 0.0
        %v2207 = vmax.f32 %v1574, 0.0
        %v2208 = vmax.f32 %v1576, 0.0
        %v2209 = vmax.f32 %v1579, 0.0
        %v2210 = vmax.f32 %v1581, 0.0
        %v2211 = vmax.f32 %v1584, 0.0
        %v2212 = vmax.f32 %v1586, 0.0
        %v2213 = vmax.f32 %v1589, 0.0
        %v2214 = vmax.f32 %v1591, 0.0
        %v2215 = vmax.f32 %v1594, 0.0
        %v2216 = vmax.f32 %v1596, 0.0
        %v2217 = vmax.f32 %v1599, 0.0
        %v2218 = vmax.f32 %v1601, 0.0
        %v2219 = vmax.f32 %v1604, 0.0
        %v2220 = vmax.f32 %v1606, 0.0
        %v2221 = vmax.f32 %v1609, 0.0
        %v2222 = vmax.f32 %v1611, 0.0
        %v2223 = vmax.f32 %v1614, 0.0
        %v2224 = vmax.f32 %v1616, 0.0
        %v2225 = vmax.f32 %v1619, 0.0
        %v2226 = vmax.f32 %v1621, 0.0
        %v2227 = vmax.f32 %v1624, 0.0
        %v2228 = vmax.f32 %v1626, 0.0
        %v2229 = vmax.f32 %v1629, 0.0
        %v2230 = vmax.f32 %v1631, 0.0
        %v2231 = vmax.f32 %v1634, 0.0
        %v2232 = vmax.f32 %v1636, 0.0
        %v2233 = vmax.f32 %v1639, 0.0
        %v2234 = vmax.f32 %v1641, 0.0
        %v2235 = vmax.f32 %v1644, 0.0
        %v2236 = vmax.f32 %v1646, 0.0
        %v2237 = vmax.f32 %v1649, 0.0
        %v2238 = vmax.f32 %v1651, 0.0
        %v2239 = vmax.f32 %v1654, 0.0
        %v2240 = vmax.f32 %v1656, 0.0
        %v2241 = vmax.f32 %v1659, 0.0
        %v2242 = vmax.f32 %v1661, 0.0
        %v2243 = vmax.f32 %v1664, 0.0
        %v2244 = vmax.f32 %v1666, 0.0
        %v2245 = vmax.f32 %v1669, 0.0
        %v2246 = vmax.f32 %v1671, 0.0
        %v2247 = vmax.f32 %v1674, 0.0
        %v2248 = vmax.f32 %v1676, 0.0
        %v2249 = vmax.f32 %v1679, 0.0
        %v2250 = vmax.f32 %v1681, 0.0
        %v2251 = vmax.f32 %v1684, 0.0
        %v2252 = vmax.f32 %v1686, 0.0
        %v2253 = vmax.f32 %v1689, 0.0
        %v2254 = vmax.f32 %v1691, 0.0
        %v2255 = vmax.f32 %v1694, 0.0
        %v2256 = vmax.f32 %v1696, 0.0
        %v2257 = vmax.f32 %v1699, 0.0
        %v2258 = vmax.f32 %v1701, 0.0
        %v2259 = vmax.f32 %v1704, 0.0
        %v2260 = vmax.f32 %v1706, 0.0
        %v2261 = vmax.f32 %v1709, 0.0
        %v2262 = vmax.f32 %v1711, 0.0
        %v2263 = vmax.f32 %v1714, 0.0
        %v2264 = vmax.f32 %v1716, 0.0
        %v2265 = vmax.f32 %v1719, 0.0
        %v2266 = vmax.f32 %v1721, 0.0
        %v2267 = vmax.f32 %v1724, 0.0
        %v2268 = vmax.f32 %v1726, 0.0
        %v2269 = vmax.f32 %v1729, 0.0
        %v2270 = vmax.f32 %v1731, 0.0
        %v2271 = vmax.f32 %v1734, 0.0
        %v2272 = vmax.f32 %v1736, 0.0
        %v2273 = vmax.f32 %v1739, 0.0
        %v2274 = vmax.f32 %v1741, 0.0
        %v2275 = vmax.f32 %v1744, 0.0
        %v2276 = vmax.f32 %v1746, 0.0
        %v2277 = vmax.f32 %v1749, 0.0
        %v2278 = vmax.f32 %v1751, 0.0
        %v2279 = vmax.f32 %v1754, 0.0
        %v2280 = vmax.f32 %v1756, 0.0
        %v2281 = vmax.f32 %v1759, 0.0
        %v2282 = vmax.f32 %v1761, 0.0
        %v2283 = vmax.f32 %v1764, 0.0
        %v2284 = vmax.f32 %v1766, 0.0
        %v2285 = vmax.f32 %v1769, 0.0
        %v2286 = vmax.f32 %v1771, 0.0
        %v2287 = vmax.f32 %v1774, 0.0
        %v2288 = vmax.f32 %v1776, 0.0
        %v2289 = vmax.f32 %v1779, 0.0
        %v2290 = vmax.f32 %v1781, 0.0
        %v2291 = vmax.f32 %v1784, 0.0
        %v2292 = vmax.f32 %v1786, 0.0
        %v2293 = vmax.f32 %v1789, 0.0
        %v2294 = vmax.f32 %v1791, 0.0
        %v2295 = vmax.f32 %v1794, 0.0
        %v2296 = vmax.f32 %v1796, 0.0
        %v2297 = vmax.f32 %v1799, 0.0
        %v2298 = vmax.f32 %v1801, 0.0
        %v2299 = vmax.f32 %v1804, 0.0
        %v2300 = vmax.f32 %v1806, 0.0
        %v2301 = vmax.f32 %v1809, 0.0
        %v2302 = vmax.f32 %v1811, 0.0
        %v2303 = vmax.f32 %v1814, 0.0
        %v2304 = vmax.f32 %v1816, 0.0
        %v2305 = vmax.f32 %v1819, 0.0
        %v2306 = vmax.f32 %v1821, 0.0
        %v2307 = vmax.f32 %v1824, 0.0
        %v2308 = vmax.f32 %v1826, 0.0
        %v2309 = vmax.f32 %v1829, 0.0
        %v2310 = vmax.f32 %v1831, 0.0
        %v2311 = vmax.f32 %v1834, 0.0
        %v2312 = vmax.f32 %v1836, 0.0
        %v2313 = vmax.f32 %v1839, 0.0
        %v2314 = vmax.f32 %v1841, 0.0
        %v2315 = vmax.f32 %v1844, 0.0
        %v2316 = vmax.f32 %v1846, 0.0
        %v2317 = vmax.f32 %v1849, 0.0
        %v2318 = vmax.f32 %v1851, 0.0
        %v2319 = vmax.f32 %v1854, 0.0
        %v2320 = vmax.f32 %v1856, 0.0
        %v2321 = vmax.f32 %v1859, 0.0
        %v2322 = vmax.f32 %v1861, 0.0
        %v2323 = vmax.f32 %v1864, 0.0
        %v2324 = vmax.f32 %v1866, 0.0
        %v2325 = vmax.f32 %v1869, 0.0
        %v2326 = vmax.f32 %v1871, 0.0
        %v2327 = vmax.f32 %v1874, 0.0
        %v2328 = vmax.f32 %v1876, 0.0
        %v2329 = vmax.f32 %v1879, 0.0
        %v2330 = vmax.f32 %v1881, 0.0
        %v2331 = vmax.f32 %v1884, 0.0
        %v2332 = vmax.f32 %v1886, 0.0
        %v2333 = vmax.f32 %v1889, 0.0
        %v2334 = vmax.f32 %v1891, 0.0
        %v2335 = vmax.f32 %v1894, 0.0
        %v2336 = vmax.f32 %v1896, 0.0
        %v2337 = vmax.f32 %v1899, 0.0
        %v2338 = vmax.f32 %v1901, 0.0
        %v2339 = vmax.f32 %v1904, 0.0
        %v2340 = vmax.f32 %v1906, 0.0
        %v2341 = vmax.f32 %v1909, 0.0
        %v2342 = vmax.f32 %v1911, 0.0
        %v2343 = vmax.f32 %v1914, 0.0
        %v2344 = vmax.f32 %v1916, 0.0
        %v2345 = vmax.f32 %v1919, 0.0
        %v2346 = vmax.f32 %v1921, 0.0
        %v2347 = vmax.f32 %v1924, 0.0
        %v2348 = vmax.f32 %v1926, 0.0
        %v2349 = vmax.f32 %v1929, 0.0
        %v2350 = vmax.f32 %v1931, 0.0
        %v2351 = vmax.f32 %v1934, 0.0
        %v2352 = vmax.f32 %v1936, 0.0
        %v2353 = vmax.f32 %v1939, 0.0
        %v2354 = vmax.f32 %v1941, 0.0
        %v2355 = vmax.f32 %v1944, 0.0
        %v2356 = vmax.f32 %v1946, 0.0
        %v2357 = vmax.f32 %v1949, 0.0
        %v2358 = vmax.f32 %v1951, 0.0
        %v2359 = vmax.f32 %v1954, 0.0
        %v2360 = vmax.f32 %v1956, 0.0
        %v2361 = vmax.f32 %v1959, 0.0
        %v2362 = vmax.f32 %v1961, 0.0
        %v2363 = vmax.f32 %v1964, 0.0
        %v2364 = vmax.f32 %v1966, 0.0
        %v2365 = vmax.f32 %v1969, 0.0
        %v2366 = vmax.f32 %v1971, 0.0
        %v2367 = vmax.f32 %v1974, 0.0
        %v2368 = vmax.f32 %v1976, 0.0
        %v2369 = vmax.f32 %v1979, 0.0
        %v2370 = vmax.f32 %v1981, 0.0
        %v2371 = vmax.f32 %v1984, 0.0
        %v2372 = vmax.f32 %v1986, 0.0
        %v2373 = vmax.f32 %v1989, 0.0
        %v2374 = vmax.f32 %v1991, 0.0
        %v2375 = vmax.f32 %v1994, 0.0
        %v2376 = vmax.f32 %v1996, 0.0
        %v2377 = vmax.f32 %v1999, 0.0
        %v2378 = vmax.f32 %v2001, 0.0
        %v2379 = vmax.f32 %v2004, 0.0
        %v2380 = vmax.f32 %v2006, 0.0
        %v2381 = vmax.f32 %v2009, 0.0
        %v2382 = vmax.f32 %v2011, 0.0
        %v2383 = vmax.f32 %v2014, 0.0
        %v2384 = vmax.f32 %v2016, 0.0
        %v2385 = vmax.f32 %v2019, 0.0
        %v2386 = vmax.f32 %v2021, 0.0
        %v2387 = vmax.f32 %v2024, 0.0
        %v2388 = vmax.f32 %v2026, 0.0
        %v2389 = vmax.f32 %v2029, 0.0
        %v2390 = vmax.f32 %v2031, 0.0
        %v2391 = vmax.f32 %v2034, 0.0
        %v2392 = vmax.f32 %v2036, 0.0
        %v2393 = vmax.f32 %v2039, 0.0
        %v2394 = vmax.f32 %v2041, 0.0
        %v2395 = vmax.f32 %v2044, 0.0
        %v2396 = vmax.f32 %v2046, 0.0
        %v2397 = vmax.f32 %v2049, 0.0
        %v2398 = vmax.f32 %v2051, 0.0
        %v2399 = vmax.f32 %v2054, 0.0
        %v2400 = vmax.f32 %v2056, 0.0
        %v2401 = vmax.f32 %v2059, 0.0
        %v2402 = vmax.f32 %v2061, 0.0
        %v2403 = vmax.f32 %v2064, 0.0
        %v2404 = vmax.f32 %v2066, 0.0
        %v2405 = vmax.f32 %v2069, 0.0
        %v2406 = vmax.f32 %v2071, 0.0
        %v2407 = vmax.f32 %v2074, 0.0
        %v2408 = vmax.f32 %v2076, 0.0
        %v2409 = vmax.f32 %v2079, 0.0
        %v2410 = vmax.f32 %v2081, 0.0
        %v2411 = vmax.f32 %v2084, 0.0
        %v2412 = vmax.f32 %v2086, 0.0
        %v2413 = vmax.f32 %v2089, 0.0
        %v2414 = vmax.f32 %v2091, 0.0
        %v2415 = vmax.f32 %v2094, 0.0
        %v2416 = vmax.f32 %v2096, 0.0
        %v2417 = vmax.f32 %v2099, 0.0
        %v2418 = vmax.f32 %v2101, 0.0
        %v2419 = vmax.f32 %v2104, 0.0
        %v2420 = vmax.f32 %v2106, 0.0
        %v2421 = vmax.f32 %v2109, 0.0
        %v2422 = vmax.f32 %v2111, 0.0
        %v2423 = vmax.f32 %v2114, 0.0
        %v2424 = vmax.f32 %v2116, 0.0
        %v2425 = vmax.f32 %v2119, 0.0
        %v2426 = vmax.f32 %v2121, 0.0
        %v2427 = vmax.f32 %v2124, 0.0
        %v2428 = vmax.f32 %v2126, 0.0
        %v2429 = vmax.f32 %v2129, 0.0
        %v2430 = vmax.f32 %v2131, 0.0
        %v2431 = vmax.f32 %v2134, 0.0
        %v2432 = vmax.f32 %v2136, 0.0
        %v2433 = vmax.f32 %v2139, 0.0
        %v2434 = vmax.f32 %v2141, 0.0
        %v2435 = vmax.f32 %v2144, 0.0
        %v2436 = vmax.f32 %v2146, 0.0
        %v2437 = vmax.f32 %v2149, 0.0
        %v2438 = vmax.f32 %v2151, 0.0
        %v2439 = vmax.f32 %v2154, 0.0
        %v2440 = vmax.f32 %v2156, 0.0
        %v2441 = vmax.f32 %v2159, 0.0
        %v2442 = vmax.f32 %v2161, 0.0
        %v2443 = vmax.f32 %v2164, 0.0
        %v2444 = vmax.f32 %v2166, 0.0
        %v2445 = vmax.f32 %v2169, 0.0
        %v2446 = vmax.f32 %v2171, 0.0
        %v2447 = vmax.f32 %v2174, 0.0
        %v2448 = vmax.f32 %v2176, 0.0
        %v2449 = vmax.f32 %v2179, 0.0
        %v2450 = vmax.f32 %v2181, 0.0
        %v2451 = vmax.f32 %v2184, 0.0
        %v2452 = vmax.f32 %v2186, 0.0
        %v2453 = vmax.f32 %v2189, 0.0
        %v2454 = vmax.f32 %v2191, 0.0
        %v2455 = vmax.f32 %v2194, 0.0
        %v2456 = vmax.f32 %v2196, 0.0
        %v2457 = vmax.f32 %v2199, 0.0
        %v2458 = vmax.f32 %v2201, 0.0
        %v2459 = vld [vmem:[%s1] sm:$0xff]
        %v2460 = vld [vmem:[%s1 + $0x8] sm:$0xff]
        %v2461 = vld [vmem:[%s1 + $0x10] sm:$0xff]
        %v2462 = vld [vmem:[%s1 + $0x18] sm:$0xff]
        %v2463 = vld [vmem:[%s1 + $0x20] sm:$0xff]
        %v2464 = vld [vmem:[%s1 + $0x28] sm:$0xff]
        %v2465 = vld [vmem:[%s1 + $0x30] sm:$0xff]
        %v2466 = vld [vmem:[%s1 + $0x38] sm:$0xff]
        %v2467 = vpack.c.bf16 %v2204, %v2203
        %v2468 = vpack.c.bf16 %v2206, %v2205
        %v2469 = vpack.c.bf16 %v2208, %v2207
        %v2470 = vpack.c.bf16 %v2210, %v2209
        %v2471 = vpack.c.bf16 %v2212, %v2211
        %v2472 = vpack.c.bf16 %v2214, %v2213
        %v2473 = vpack.c.bf16 %v2216, %v2215
        %v2474 = vpack.c.bf16 %v2218, %v2217
        %v2475 = vpack.c.bf16 %v2220, %v2219
        %v2476 = vpack.c.bf16 %v2222, %v2221
        %v2477 = vpack.c.bf16 %v2224, %v2223
        %v2478 = vpack.c.bf16 %v2226, %v2225
        %v2479 = vpack.c.bf16 %v2228, %v2227
        %v2480 = vpack.c.bf16 %v2230, %v2229
        %v2481 = vpack.c.bf16 %v2232, %v2231
        %v2482 = vpack.c.bf16 %v2234, %v2233
        %v2483 = vpack.c.bf16 %v2236, %v2235
        %v2484 = vpack.c.bf16 %v2238, %v2237
        %v2485 = vpack.c.bf16 %v2240, %v2239
        %v2486 = vpack.c.bf16 %v2242, %v2241
        %v2487 = vpack.c.bf16 %v2244, %v2243
        %v2488 = vpack.c.bf16 %v2246, %v2245
        %v2489 = vpack.c.bf16 %v2248, %v2247
        %v2490 = vpack.c.bf16 %v2250, %v2249
        %v2491 = vpack.c.bf16 %v2252, %v2251
        %v2492 = vpack.c.bf16 %v2254, %v2253
        %v2493 = vpack.c.bf16 %v2256, %v2255
        %v2494 = vpack.c.bf16 %v2258, %v2257
        %v2495 = vpack.c.bf16 %v2260, %v2259
        %v2496 = vpack.c.bf16 %v2262, %v2261
        %v2497 = vpack.c.bf16 %v2264, %v2263
        %v2498 = vpack.c.bf16 %v2266, %v2265
        %v2499 = vpack.c.bf16 %v2268, %v2267
        %v2500 = vpack.c.bf16 %v2270, %v2269
        %v2501 = vpack.c.bf16 %v2272, %v2271
        %v2502 = vpack.c.bf16 %v2274, %v2273
        %v2503 = vpack.c.bf16 %v2276, %v2275
        %v2504 = vpack.c.bf16 %v2278, %v2277
        %v2505 = vpack.c.bf16 %v2280, %v2279
        %v2506 = vpack.c.bf16 %v2282, %v2281
        %v2507 = vpack.c.bf16 %v2284, %v2283
        %v2508 = vpack.c.bf16 %v2286, %v2285
        %v2509 = vpack.c.bf16 %v2288, %v2287
        %v2510 = vpack.c.bf16 %v2290, %v2289
        %v2511 = vpack.c.bf16 %v2292, %v2291
        %v2512 = vpack.c.bf16 %v2294, %v2293
        %v2513 = vpack.c.bf16 %v2296, %v2295
        %v2514 = vpack.c.bf16 %v2298, %v2297
        %v2515 = vpack.c.bf16 %v2300, %v2299
        %v2516 = vpack.c.bf16 %v2302, %v2301
        %v2517 = vpack.c.bf16 %v2304, %v2303
        %v2518 = vpack.c.bf16 %v2306, %v2305
        %v2519 = vpack.c.bf16 %v2308, %v2307
        %v2520 = vpack.c.bf16 %v2310, %v2309
        %v2521 = vpack.c.bf16 %v2312, %v2311
        %v2522 = vpack.c.bf16 %v2314, %v2313
        %v2523 = vpack.c.bf16 %v2316, %v2315
        %v2524 = vpack.c.bf16 %v2318, %v2317
        %v2525 = vpack.c.bf16 %v2320, %v2319
        %v2526 = vpack.c.bf16 %v2322, %v2321
        %v2527 = vpack.c.bf16 %v2324, %v2323
        %v2528 = vpack.c.bf16 %v2326, %v2325
        %v2529 = vpack.c.bf16 %v2328, %v2327
        %v2530 = vpack.c.bf16 %v2330, %v2329
        %v2531 = vpack.c.bf16 %v2332, %v2331
        %v2532 = vpack.c.bf16 %v2334, %v2333
        %v2533 = vpack.c.bf16 %v2336, %v2335
        %v2534 = vpack.c.bf16 %v2338, %v2337
        %v2535 = vpack.c.bf16 %v2340, %v2339
        %v2536 = vpack.c.bf16 %v2342, %v2341
        %v2537 = vpack.c.bf16 %v2344, %v2343
        %v2538 = vpack.c.bf16 %v2346, %v2345
        %v2539 = vpack.c.bf16 %v2348, %v2347
        %v2540 = vpack.c.bf16 %v2350, %v2349
        %v2541 = vpack.c.bf16 %v2352, %v2351
        %v2542 = vpack.c.bf16 %v2354, %v2353
        %v2543 = vpack.c.bf16 %v2356, %v2355
        %v2544 = vpack.c.bf16 %v2358, %v2357
        %v2545 = vpack.c.bf16 %v2360, %v2359
        %v2546 = vpack.c.bf16 %v2362, %v2361
        %v2547 = vpack.c.bf16 %v2364, %v2363
        %v2548 = vpack.c.bf16 %v2366, %v2365
        %v2549 = vpack.c.bf16 %v2368, %v2367
        %v2550 = vpack.c.bf16 %v2370, %v2369
        %v2551 = vpack.c.bf16 %v2372, %v2371
        %v2552 = vpack.c.bf16 %v2374, %v2373
        %v2553 = vpack.c.bf16 %v2376, %v2375
        %v2554 = vpack.c.bf16 %v2378, %v2377
        %v2555 = vpack.c.bf16 %v2380, %v2379
        %v2556 = vpack.c.bf16 %v2382, %v2381
        %v2557 = vpack.c.bf16 %v2384, %v2383
        %v2558 = vpack.c.bf16 %v2386, %v2385
        %v2559 = vpack.c.bf16 %v2388, %v2387
        %v2560 = vpack.c.bf16 %v2390, %v2389
        %v2561 = vpack.c.bf16 %v2392, %v2391
        %v2562 = vpack.c.bf16 %v2394, %v2393
        %v2563 = vpack.c.bf16 %v2396, %v2395
        %v2564 = vpack.c.bf16 %v2398, %v2397
        %v2565 = vpack.c.bf16 %v2400, %v2399
        %v2566 = vpack.c.bf16 %v2402, %v2401
        %v2567 = vpack.c.bf16 %v2404, %v2403
        %v2568 = vpack.c.bf16 %v2406, %v2405
        %v2569 = vpack.c.bf16 %v2408, %v2407
        %v2570 = vpack.c.bf16 %v2410, %v2409
        %v2571 = vpack.c.bf16 %v2412, %v2411
        %v2572 = vpack.c.bf16 %v2414, %v2413
        %v2573 = vpack.c.bf16 %v2416, %v2415
        %v2574 = vpack.c.bf16 %v2418, %v2417
        %v2575 = vpack.c.bf16 %v2420, %v2419
        %v2576 = vpack.c.bf16 %v2422, %v2421
        %v2577 = vpack.c.bf16 %v2424, %v2423
        %v2578 = vpack.c.bf16 %v2426, %v2425
        %v2579 = vpack.c.bf16 %v2428, %v2427
        %v2580 = vpack.c.bf16 %v2430, %v2429
        %v2581 = vpack.c.bf16 %v2432, %v2431
        %v2582 = vpack.c.bf16 %v2434, %v2433
        %v2583 = vpack.c.bf16 %v2436, %v2435
        %v2584 = vpack.c.bf16 %v2438, %v2437
        %v2585 = vpack.c.bf16 %v2440, %v2439
        %v2586 = vpack.c.bf16 %v2442, %v2441
        %v2587 = vpack.c.bf16 %v2444, %v2443
        %v2588 = vpack.c.bf16 %v2446, %v2445
        %v2589 = vpack.c.bf16 %v2448, %v2447
        %v2590 = vpack.c.bf16 %v2450, %v2449
        %v2591 = vpack.c.bf16 %v2452, %v2451
        %v2592 = vpack.c.bf16 %v2454, %v2453
        %v2593 = vpack.c.bf16 %v2456, %v2455
        %v2594 = vpack.c.bf16 %v2458, %v2457
        %v2603 = vunpack.c.l.b16 %v2459
        %v2604 = vunpack.c.h.b16 %v2459
        %v2605 = vunpack.c.l.b16 %v2460
        %v2606 = vunpack.c.h.b16 %v2460
        %v2607 = vunpack.c.l.b16 %v2461
        %v2608 = vunpack.c.h.b16 %v2461
        %v2609 = vunpack.c.l.b16 %v2462
        %v2610 = vunpack.c.h.b16 %v2462
        %v2611 = vunpack.c.l.b16 %v2463
        %v2612 = vunpack.c.h.b16 %v2463
        %v2613 = vunpack.c.l.b16 %v2464
        %v2614 = vunpack.c.h.b16 %v2464
        %v2615 = vunpack.c.l.b16 %v2465
        %v2616 = vunpack.c.h.b16 %v2465
        %v2617 = vunpack.c.l.b16 %v2466
        %v2618 = vunpack.c.h.b16 %v2466
        %v2619 = vpack.c.b16 %v2603, %v2603
        %v2620 = vpack.c.b16 %v2604, %v2604
        %v2621 = vpack.c.b16 %v2605, %v2605
        %v2622 = vpack.c.b16 %v2606, %v2606
        %v2623 = vpack.c.b16 %v2607, %v2607
        %v2624 = vpack.c.b16 %v2608, %v2608
        %v2625 = vpack.c.b16 %v2609, %v2609
        %v2626 = vpack.c.b16 %v2610, %v2610
        %v2627 = vpack.c.b16 %v2611, %v2611
        %v2628 = vpack.c.b16 %v2612, %v2612
        %v2629 = vpack.c.b16 %v2613, %v2613
        %v2630 = vpack.c.b16 %v2614, %v2614
        %v2631 = vpack.c.b16 %v2615, %v2615
        %v2632 = vpack.c.b16 %v2616, %v2616
        %v2633 = vpack.c.b16 %v2617, %v2617
        %v2634 = vpack.c.b16 %v2618, %v2618
        %2651 = vmatpush.bf16.msra.mxu0 %v2474
        %2652 = vmatpush.bf16.msra.mxu0 %v2473
        %2653 = vmatpush.bf16.msra.mxu0 %v2472
        %2654 = vmatpush.bf16.msra.mxu0 %v2471
        %2655 = vmatpush.bf16.msra.mxu0 %v2470
        %2656 = vmatpush.bf16.msra.mxu0 %v2469
        %2657 = vmatpush.bf16.msra.mxu0 %v2468
        %2658 = vmatpush.bf16.msra.mxu0 %v2467
        %2659 = vmatmul.bf16.gmra.mxu0 %v2619
        %v2660 = vpop.f32.mrf.mxu0
        %v2661 = vadd.f32 0.0, %v2660
        %v2662 = vpop.f32.mrf.mxu0
        %2663 = vdwg.mxu0
        %2664 = vmatpush.bf16.msra.mxu0 %v2482
        %2665 = vmatpush.bf16.msra.mxu0 %v2481
        %2666 = vmatpush.bf16.msra.mxu0 %v2480
        %2667 = vmatpush.bf16.msra.mxu0 %v2479
        %2668 = vmatpush.bf16.msra.mxu0 %v2478
        %2669 = vmatpush.bf16.msra.mxu0 %v2477
        %2670 = vmatpush.bf16.msra.mxu0 %v2476
        %2671 = vmatpush.bf16.msra.mxu0 %v2475
        %2672 = vmatmul.bf16.gmra.mxu0 %v2620
        %v2673 = vpop.f32.mrf.mxu0
        %v2674 = vadd.f32 %v2661, %v2673
        %v2675 = vpop.f32.mrf.mxu0
        %2676 = vdwg.mxu0
        %2677 = vmatpush.bf16.msra.mxu0 %v2490
        %2678 = vmatpush.bf16.msra.mxu0 %v2489
        %2679 = vmatpush.bf16.msra.mxu0 %v2488
        %2680 = vmatpush.bf16.msra.mxu0 %v2487
        %2681 = vmatpush.bf16.msra.mxu0 %v2486
        %2682 = vmatpush.bf16.msra.mxu0 %v2485
        %2683 = vmatpush.bf16.msra.mxu0 %v2484
        %2684 = vmatpush.bf16.msra.mxu0 %v2483
        %2685 = vmatmul.bf16.gmra.mxu0 %v2621
        %v2686 = vpop.f32.mrf.mxu0
        %v2687 = vadd.f32 %v2674, %v2686
        %v2688 = vpop.f32.mrf.mxu0
        %2689 = vdwg.mxu0
        %2690 = vmatpush.bf16.msra.mxu0 %v2498
        %2691 = vmatpush.bf16.msra.mxu0 %v2497
        %2692 = vmatpush.bf16.msra.mxu0 %v2496
        %2693 = vmatpush.bf16.msra.mxu0 %v2495
        %2694 = vmatpush.bf16.msra.mxu0 %v2494
        %2695 = vmatpush.bf16.msra.mxu0 %v2493
        %2696 = vmatpush.bf16.msra.mxu0 %v2492
        %2697 = vmatpush.bf16.msra.mxu0 %v2491
        %2698 = vmatmul.bf16.gmra.mxu0 %v2622
        %v2699 = vpop.f32.mrf.mxu0
        %v2700 = vadd.f32 %v2687, %v2699
        %v2701 = vpop.f32.mrf.mxu0
        %2702 = vdwg.mxu0
        %2703 = vmatpush.bf16.msra.mxu0 %v2506
        %2704 = vmatpush.bf16.msra.mxu0 %v2505
        %2705 = vmatpush.bf16.msra.mxu0 %v2504
        %2706 = vmatpush.bf16.msra.mxu0 %v2503
        %2707 = vmatpush.bf16.msra.mxu0 %v2502
        %2708 = vmatpush.bf16.msra.mxu0 %v2501
        %2709 = vmatpush.bf16.msra.mxu0 %v2500
        %2710 = vmatpush.bf16.msra.mxu0 %v2499
        %2711 = vmatmul.bf16.gmra.mxu0 %v2623
        %v2712 = vpop.f32.mrf.mxu0
        %v2713 = vadd.f32 %v2700, %v2712
        %v2714 = vpop.f32.mrf.mxu0
        %2715 = vdwg.mxu0
        %2716 = vmatpush.bf16.msra.mxu0 %v2514
        %2717 = vmatpush.bf16.msra.mxu0 %v2513
        %2718 = vmatpush.bf16.msra.mxu0 %v2512
        %2719 = vmatpush.bf16.msra.mxu0 %v2511
        %2720 = vmatpush.bf16.msra.mxu0 %v2510
        %2721 = vmatpush.bf16.msra.mxu0 %v2509
        %2722 = vmatpush.bf16.msra.mxu0 %v2508
        %2723 = vmatpush.bf16.msra.mxu0 %v2507
        %2724 = vmatmul.bf16.gmra.mxu0 %v2624
        %v2725 = vpop.f32.mrf.mxu0
        %v2726 = vadd.f32 %v2713, %v2725
        %v2727 = vpop.f32.mrf.mxu0
        %2728 = vdwg.mxu0
        %2729 = vmatpush.bf16.msra.mxu0 %v2522
        %2730 = vmatpush.bf16.msra.mxu0 %v2521
        %2731 = vmatpush.bf16.msra.mxu0 %v2520
        %2732 = vmatpush.bf16.msra.mxu0 %v2519
        %2733 = vmatpush.bf16.msra.mxu0 %v2518
        %2734 = vmatpush.bf16.msra.mxu0 %v2517
        %2735 = vmatpush.bf16.msra.mxu0 %v2516
        %2736 = vmatpush.bf16.msra.mxu0 %v2515
        %2737 = vmatmul.bf16.gmra.mxu0 %v2625
        %v2738 = vpop.f32.mrf.mxu0
        %v2739 = vadd.f32 %v2726, %v2738
        %v2740 = vpop.f32.mrf.mxu0
        %2741 = vdwg.mxu0
        %2742 = vmatpush.bf16.msra.mxu0 %v2530
        %2743 = vmatpush.bf16.msra.mxu0 %v2529
        %2744 = vmatpush.bf16.msra.mxu0 %v2528
        %2745 = vmatpush.bf16.msra.mxu0 %v2527
        %2746 = vmatpush.bf16.msra.mxu0 %v2526
        %2747 = vmatpush.bf16.msra.mxu0 %v2525
        %2748 = vmatpush.bf16.msra.mxu0 %v2524
        %2749 = vmatpush.bf16.msra.mxu0 %v2523
        %2750 = vmatmul.bf16.gmra.mxu0 %v2626
        %v2751 = vpop.f32.mrf.mxu0
        %v2752 = vadd.f32 %v2739, %v2751
        %v2753 = vpop.f32.mrf.mxu0
        %2754 = vdwg.mxu0
        %2755 = vmatpush.bf16.msra.mxu0 %v2538
        %2756 = vmatpush.bf16.msra.mxu0 %v2537
        %2757 = vmatpush.bf16.msra.mxu0 %v2536
        %2758 = vmatpush.bf16.msra.mxu0 %v2535
        %2759 = vmatpush.bf16.msra.mxu0 %v2534
        %2760 = vmatpush.bf16.msra.mxu0 %v2533
        %2761 = vmatpush.bf16.msra.mxu0 %v2532
        %2762 = vmatpush.bf16.msra.mxu0 %v2531
        %2763 = vmatmul.bf16.gmra.mxu0 %v2627
        %v2764 = vpop.f32.mrf.mxu0
        %v2765 = vadd.f32 %v2752, %v2764
        %v2766 = vpop.f32.mrf.mxu0
        %2767 = vdwg.mxu0
        %2768 = vmatpush.bf16.msra.mxu0 %v2546
        %2769 = vmatpush.bf16.msra.mxu0 %v2545
        %2770 = vmatpush.bf16.msra.mxu0 %v2544
        %2771 = vmatpush.bf16.msra.mxu0 %v2543
        %2772 = vmatpush.bf16.msra.mxu0 %v2542
        %2773 = vmatpush.bf16.msra.mxu0 %v2541
        %2774 = vmatpush.bf16.msra.mxu0 %v2540
        %2775 = vmatpush.bf16.msra.mxu0 %v2539
        %2776 = vmatmul.bf16.gmra.mxu0 %v2628
        %v2777 = vpop.f32.mrf.mxu0
        %v2778 = vadd.f32 %v2765, %v2777
        %v2779 = vpop.f32.mrf.mxu0
        %2780 = vdwg.mxu0
        %2781 = vmatpush.bf16.msra.mxu0 %v2554
        %2782 = vmatpush.bf16.msra.mxu0 %v2553
        %2783 = vmatpush.bf16.msra.mxu0 %v2552
        %2784 = vmatpush.bf16.msra.mxu0 %v2551
        %2785 = vmatpush.bf16.msra.mxu0 %v2550
        %2786 = vmatpush.bf16.msra.mxu0 %v2549
        %2787 = vmatpush.bf16.msra.mxu0 %v2548
        %2788 = vmatpush.bf16.msra.mxu0 %v2547
        %2789 = vmatmul.bf16.gmra.mxu0 %v2629
        %v2790 = vpop.f32.mrf.mxu0
        %v2791 = vadd.f32 %v2778, %v2790
        %v2792 = vpop.f32.mrf.mxu0
        %2793 = vdwg.mxu0
        %2794 = vmatpush.bf16.msra.mxu0 %v2562
        %2795 = vmatpush.bf16.msra.mxu0 %v2561
        %2796 = vmatpush.bf16.msra.mxu0 %v2560
        %2797 = vmatpush.bf16.msra.mxu0 %v2559
        %2798 = vmatpush.bf16.msra.mxu0 %v2558
        %2799 = vmatpush.bf16.msra.mxu0 %v2557
        %2800 = vmatpush.bf16.msra.mxu0 %v2556
        %2801 = vmatpush.bf16.msra.mxu0 %v2555
        %2802 = vmatmul.bf16.gmra.mxu0 %v2630
        %v2803 = vpop.f32.mrf.mxu0
        %v2804 = vadd.f32 %v2791, %v2803
        %v2805 = vpop.f32.mrf.mxu0
        %2806 = vdwg.mxu0
        %2807 = vmatpush.bf16.msra.mxu0 %v2570
        %2808 = vmatpush.bf16.msra.mxu0 %v2569
        %2809 = vmatpush.bf16.msra.mxu0 %v2568
        %2810 = vmatpush.bf16.msra.mxu0 %v2567
        %2811 = vmatpush.bf16.msra.mxu0 %v2566
        %2812 = vmatpush.bf16.msra.mxu0 %v2565
        %2813 = vmatpush.bf16.msra.mxu0 %v2564
        %2814 = vmatpush.bf16.msra.mxu0 %v2563
        %2815 = vmatmul.bf16.gmra.mxu0 %v2631
        %v2816 = vpop.f32.mrf.mxu0
        %v2817 = vadd.f32 %v2804, %v2816
        %v2818 = vpop.f32.mrf.mxu0
        %2819 = vdwg.mxu0
        %2820 = vmatpush.bf16.msra.mxu0 %v2578
        %2821 = vmatpush.bf16.msra.mxu0 %v2577
        %2822 = vmatpush.bf16.msra.mxu0 %v2576
        %2823 = vmatpush.bf16.msra.mxu0 %v2575
        %2824 = vmatpush.bf16.msra.mxu0 %v2574
        %2825 = vmatpush.bf16.msra.mxu0 %v2573
        %2826 = vmatpush.bf16.msra.mxu0 %v2572
        %2827 = vmatpush.bf16.msra.mxu0 %v2571
        %2828 = vmatmul.bf16.gmra.mxu0 %v2632
        %v2829 = vpop.f32.mrf.mxu0
        %v2830 = vadd.f32 %v2817, %v2829
        %v2831 = vpop.f32.mrf.mxu0
        %2832 = vdwg.mxu0
        %2833 = vmatpush.bf16.msra.mxu0 %v2586
        %2834 = vmatpush.bf16.msra.mxu0 %v2585
        %2835 = vmatpush.bf16.msra.mxu0 %v2584
        %2836 = vmatpush.bf16.msra.mxu0 %v2583
        %2837 = vmatpush.bf16.msra.mxu0 %v2582
        %2838 = vmatpush.bf16.msra.mxu0 %v2581
        %2839 = vmatpush.bf16.msra.mxu0 %v2580
        %2840 = vmatpush.bf16.msra.mxu0 %v2579
        %2841 = vmatmul.bf16.gmra.mxu0 %v2633
        %v2842 = vpop.f32.mrf.mxu0
        %v2843 = vadd.f32 %v2830, %v2842
        %v2844 = vpop.f32.mrf.mxu0
        %2845 = vdwg.mxu0
        %2846 = vmatpush.bf16.msra.mxu0 %v2594
        %2847 = vmatpush.bf16.msra.mxu0 %v2593
        %2848 = vmatpush.bf16.msra.mxu0 %v2592
        %2849 = vmatpush.bf16.msra.mxu0 %v2591
        %2850 = vmatpush.bf16.msra.mxu0 %v2590
        %2851 = vmatpush.bf16.msra.mxu0 %v2589
        %2852 = vmatpush.bf16.msra.mxu0 %v2588
        %2853 = vmatpush.bf16.msra.mxu0 %v2587
        %2854 = vmatmul.bf16.gmra.mxu0 %v2634
        %v2855 = vpop.f32.mrf.mxu0
        %v2856 = vadd.f32 %v2843, %v2855
        %v2857 = vpop.f32.mrf.mxu0
        %2858 = vdwg.mxu0
        %v2859 = vpack.c.bf16 %v2856, %v2856
        %v2860 = vld [vmem:[%s4] sm:$0xff]
        %v2861 = vld [vmem:[%s4 + $0x8] sm:$0xff]
        %v2862 = vld [vmem:[%s4 + $0x10] sm:$0xff]
        %v2863 = vld [vmem:[%s4 + $0x18] sm:$0xff]
        %v2864 = vld [vmem:[%s5] sm:$0x3]
        %v2866 = vperm.slane %v2864, 0
        %v2867 = vperm.slane %v2864, 1
        %v2874 = vunpack.c.l.b16 %v2860
        %v2875 = vunpack.c.h.b16 %v2860
        %v2876 = vunpack.c.l.b16 %v2861
        %v2877 = vunpack.c.h.b16 %v2861
        %v2878 = vunpack.c.l.b16 %v2862
        %v2879 = vunpack.c.h.b16 %v2862
        %v2880 = vunpack.c.l.b16 %v2863
        %v2881 = vunpack.c.h.b16 %v2863
        %v2882 = vpack.c.b16 %v2876, %v2874
        %v2883 = vpack.c.b16 %v2877, %v2875
        %v2884 = vpack.c.b16 %v2880, %v2878
        %v2885 = vpack.c.b16 %v2881, %v2879
        %v2891 = vsel %vm1169, %v2859, 0
        %2893 = vmatpush.bf16.msra.mxu0 0
        %2894 = vmatpush.bf16.msra.mxu0 0
        %2895 = vmatpush.bf16.msra.mxu0 0
        %2896 = vmatpush.bf16.msra.mxu0 0
        %2897 = vmatpush.bf16.msra.mxu0 0
        %2898 = vmatpush.bf16.msra.mxu0 0
        %2899 = vmatpush.bf16.msra.mxu0 %v2884
        %2900 = vmatpush.bf16.msra.mxu0 %v2882
        %2901 = vmatmul.bf16.gmra.mxu0 %v2891
        %v2902 = vpop.f32.mrf.mxu0
        %v2903 = vadd.f32 %v2866, %v2902
        %v2904 = vpop.f32.mrf.mxu0
        %2905 = vdwg.mxu0
        %2906 = vmatpush.bf16.msra.mxu0 0
        %2907 = vmatpush.bf16.msra.mxu0 0
        %2908 = vmatpush.bf16.msra.mxu0 0
        %2909 = vmatpush.bf16.msra.mxu0 0
        %2910 = vmatpush.bf16.msra.mxu0 0
        %2911 = vmatpush.bf16.msra.mxu0 0
        %2912 = vmatpush.bf16.msra.mxu0 %v2885
        %2913 = vmatpush.bf16.msra.mxu0 %v2883
        %2914 = vmatmul.bf16.gmra.mxu0 %v2891
        %v2915 = vpop.f32.mrf.mxu0
        %v2916 = vadd.f32 %v2867, %v2915
        %v2917 = vpop.f32.mrf.mxu0
        %2918 = vdwg.mxu0
        %2919 = vst [vmem:[%s245] sm:$0xff] %v2903
        %2920 = vst [vmem:[%s245 + $0x8] sm:$0xff] %v2916
        %s2921 = sand.u32 %s159, 1
        %s2922 = scalar_lea.sflag [#allocation3], %s2921
        %s2923 = sand.u32 %s159, 1
        %s2924 = smul.addr %s2923, 16
        %s2925 = scalar_lea.vmem [#allocation2], %s2924
        // Predicated region
        $region45: #{img_model_v0_forward.1} parent=43 // pred_check
          %p2926 = pneg %p169
        $region46: #{img_model_v0_forward.1} parent=43 // pred_check_branch
          %2928 = sbr.rel (%p2926) target = $region48
        $region47: #{img_model_v0_forward.1} parent=43 // pred_region
          %2930 = vsyncadd %s2922, 0
          %s2931 = smul.addr %s20, 2
          %s2932 = smul.addr %s2931, 8
          %s2933 = scalar_lea.hbm %s6, %s2932
          %s2935 = sshll.u32 %s2925, 4
          %s2936 = int_to_ptr.vmem [resolvable:$true] %s2935
          %s2937 = sshll.u32 %s2933, 4
          %s2938 = int_to_ptr.hbm [resolvable:$true] %s2937
          %2940 = dma.vmem_to_hbm [thread:$0]  %s2936, 256, %s2938, %s2922
        $region48: #{img_model_v0_forward.1} parent=43 // pred_fallthru
          _
      $region44: #{img_model_v0_forward.1} parent=5 // pred_fallthru
        _
      %p2941 = scmp.le.s32.totalorder 2, %s15
      // Predicated region
      $region49: #{img_model_v0_forward.1} parent=5 // pred_check
        %p2942 = pneg %p2941
      $region50: #{img_model_v0_forward.1} parent=5 // pred_check_branch
        %2944 = sbr.rel (%p2942) target = $region52
      $region51: #{img_model_v0_forward.1} parent=5 // pred_region
        %s2945 = ssub.s32 %s15, 2
        // Predicated region
        $region53: #{img_model_v0_forward.1} parent=51 // pred_check
          %p2946 = pneg %p175
        $region54: #{img_model_v0_forward.1} parent=51 // pred_check_branch
          %2948 = sbr.rel (%p2946) target = $region56
        $region55: #{img_model_v0_forward.1} parent=51 // pred_region
          %s2949 = sand.u32 %s160, 1
          %s2950 = scalar_lea.sflag [#allocation3], %s2949
          %s2951 = sand.u32 %s160, 1
          %s2952 = smul.addr %s2951, 16
          %s2953 = scalar_lea.vmem [#allocation2], %s2952
          %2955 = dma.done %s2950, 256
        $region56: #{img_model_v0_forward.1} parent=51 // pred_fallthru
          _
      $region52: #{img_model_v0_forward.1} parent=5 // pred_fallthru
        _
    $region6: #{img_model_v0_forward.1} parent=1 // loop_footer
      %s19 = sadd.s32 1, %s15
    $region7: #{img_model_v0_forward.1} parent=1 // loop_footer_branch
      %14 = sbr.rel target = $region3
    $region8: #{img_model_v0_forward.1} parent=1 // loop_exit
      _
    %2956 = vsyncpa [#allocation3], 1
    %s2957 = scalar_lea.sflag [#allocation3], 1
    %2958 = vsyncpa %s2957, 1

</llo_original>
